<compile_context>
chip_gen: v7x
topology: tpu7x:2x2x1
jax: 0.10.0
libtpu: 0.0.40
codegen_flags: <defaults>
</compile_context>

<pallas_src>
import jax
import jax.numpy as jnp
from jax.experimental import pallas as pl
from jax.experimental.pallas import tpu as pltpu

_NORM_EPS = 1e-5
_NORM_SCALE = float(1.0 / (1.0 + _NORM_EPS) ** 0.5)  # eval-mode BatchNorm, default stats


# ----------------------------- fused Pallas kernel -----------------------------

def _build_kernel(num_blocks, has_head, cdtype):
    """Builds the fused forward kernel body for one batch element per grid step."""
    n_w = 6 + 4 * num_blocks + (4 if has_head else 0)

    def kernel(past_ref, future_ref, sb1_ref, sbr_ref, *rest):
        o_ref = rest[n_w]
        w = rest[:n_w]
        pwT, pb, pm_w1, pm_wo, fm_w1, fm_wo = w[0], w[1], w[2], w[3], w[4], w[5]
        blk_w = [w[6 + 4 * i: 6 + 4 * (i + 1)] for i in range(num_blocks)]
        head_w = w[6 + 4 * num_blocks: 6 + 4 * num_blocks + 4] if has_head else None

        # Per-batch static+bias vectors for every stage, loaded once (tiny block).
        sb1_all = sb1_ref[...]   # (nstages, fc_dim)  f32
        sbr_all = sbr_ref[...]   # (nstages, hidden)  f32

        def cfm(x_bf, stage, w1_ref, wo_ref):
            """ConditionalFeatureMixer: h = relu(x@W1x + sb1); out = [h,x]@[W2;Wrx] + sbr."""
            sb1 = sb1_all[stage:stage + 1, :]
            sbr = sbr_all[stage:stage + 1, :]
            h = jnp.dot(x_bf, w1_ref[...], preferred_element_type=jnp.float32) + sb1
            h = jnp.maximum(h, 0.0).astype(cdtype)
            ht = jnp.concatenate([h, x_bf], axis=-1)        # merged output matmul operand
            return jnp.dot(ht, wo_ref[...], preferred_element_type=jnp.float32) + sbr

        # --- temporal projection (Lc -> Lt) + past feature mixer ---
        xp = past_ref[...].astype(cdtype)                                    # (Lc, Fp)
        t = (jnp.dot(pwT[...], xp, preferred_element_type=jnp.float32)
             + pb[...]).astype(cdtype)                                       # (Lt, Fp)
        yp = cfm(t, 0, pm_w1, pm_wo)                                         # (Lt, H) f32

        # --- future feature mixer ---
        xf = future_ref[...].astype(cdtype)                                  # (Lt, Ff)
        yf = cfm(xf, 1, fm_w1, fm_wo)                                        # (Lt, H) f32

        y32 = jnp.concatenate([yp, yf], axis=-1)                             # (Lt, 2H)
        ybf = y32.astype(cdtype)

        # --- residual mixer blocks (Python-unrolled; activation stays in VMEM/vregs) ---
        for i in range(num_blocks):
            twT, tb, bw1, bwo = blk_w[i]
            # time mix in (L, F) layout: (scale*Wt)^T @ y  -> no activation transposes
            tmix = jnp.dot(twT[...], ybf, preferred_element_type=jnp.float32) + tb[...]
            t32 = jnp.maximum(tmix, 0.0) + y32               # residual add in f32
            tbf = t32.astype(cdtype)
            y32 = cfm(tbf, 2 + i, bw1, bwo)
            ybf = y32.astype(cdtype)

        if has_head:
            hw1, hb1, hw2, hb2 = head_w
            h = jnp.dot(ybf, hw1[...], preferred_element_type=jnp.float32) + hb1[...]
            h = jnp.maximum(h, 0.0).astype(cdtype)
            out = jnp.dot(h, hw2[...], preferred_element_type=jnp.float32) + hb2[...]
            # Final store: (Lt, out_dim) once per batch element — the only HBM store of
            # the whole forward, so its sub-128 lane width is negligible.
            o_ref[...] = out.astype(o_ref.dtype)
        else:
            o_ref[...] = y32.astype(o_ref.dtype)

    return kernel


# ----------------------------- BlockSpec helpers -----------------------------

def _full(shape):
    """Whole (shared) array as one block; constant index => DMA'd once, resident."""
    nd = len(shape)
    return pl.BlockSpec(tuple(shape), lambda b: (0,) * nd)


def _per_batch(tail_shape):
    """Leading batch dim squeezed (block size 1), full trailing dims."""
    tail = tuple(tail_shape)
    return pl.BlockSpec((None,) + tail, lambda b: (b,) + (0,) * len(tail))


def _forward_flops(b, lc, fp, lt, ff, fc_dim, hidden, num_blocks, has_head, head_out):
    fl = 2 * lt * lc * fp                                                   # temporal proj
    fl += 2 * (lt * fp * fc_dim + lt * (fc_dim + fp) * hidden)              # past mixer
    fl += 2 * (lt * ff * fc_dim + lt * (fc_dim + ff) * hidden)              # future mixer
    for i in range(num_blocks):
        fi = 2 * hidden if i == 0 else hidden
        fl += 2 * (lt * lt * fi + lt * fi * fc_dim + lt * (fc_dim + fi) * hidden)
    if has_head:
        fl += 2 * (lt * hidden * fc_dim + lt * fc_dim * head_out)
    return b * fl


# ----------------------------- fused forward wrapper -----------------------------

def _fused_forward(past, future, sb1, sbr, prep):
    cdtype = prep["compute_dtype"]
    b, lc, fp = past.shape
    lt, ff = future.shape[1], future.shape[2]
    fc_dim = prep["fc_dim"]
    hidden = prep["hidden_dim"]
    num_blocks = prep["num_blocks"]
    has_head = prep["has_head"]
    out_dim = prep["out_dim"]
    nstages = 2 + num_blocks
    weights = prep["weights"]

    in_specs = [
        _per_batch((lc, fp)),              # past covariates
        _per_batch((lt, ff)),              # future covariates
        _per_batch((nstages, fc_dim)),     # stacked static biases for fc1 of every stage
        _per_batch((nstages, hidden)),     # stacked static biases for the output of every stage
    ] + [_full(w.shape) for w in weights]  # all weights: constant-index, resident in VMEM

    args = (past, future, sb1, sbr, *weights)
    flops = _forward_flops(b, lc, fp, lt, ff, fc_dim, hidden, num_blocks, has_head,
                           prep["head_out"])
    # Accurate HBM traffic: every input array is read exactly once (weights are
    # constant-index blocks), output written once.
    nbytes = sum(int(a.size) * jnp.dtype(a.dtype).itemsize for a in args)
    nbytes += b * lt * out_dim * 4

    kernel = _build_kernel(num_blocks, has_head, cdtype)
    return pl.pallas_call(
        kernel,
        out_shape=jax.ShapeDtypeStruct((b, lt, out_dim), jnp.float32),
        grid_spec=pltpu.PrefetchScalarGridSpec(
            num_scalar_prefetch=0,
            grid=(b,),
            in_specs=in_specs,
            out_specs=_per_batch((lt, out_dim)),
        ),
        compiler_params=pltpu.CompilerParams(
            dimension_semantics=("parallel",),
            vmem_limit_bytes=64 * 1024 * 1024,
        ),
        cost_estimate=pl.CostEstimate(flops=int(flops), transcendentals=0,
                                      bytes_accessed=int(nbytes)),
    )(*args)


def _static_bias_stacks(static, stage_params):
    """Static-covariate path in plain XLA (few-wide matmuls; launch cost >> math).

    Returns per-batch bias stacks folding in b1 / (br + b2) and the static-embedding
    contribution for EVERY stage so the kernel never sees the concatenated input.
    """
    s32 = static.astype(jnp.float32)
    sb1_list, sbr_list = [], []
    for sp in stage_params:
        v = s32 @ sp["static_w"] + sp["static_b"]          # (B, Hs)
        sb1_list.append(v @ sp["w1s"] + sp["b1"])          # (B, FC)
        sbr_list.append(v @ sp["wrs"] + sp["brb2"])        # (B, H)
    return jnp.stack(sb1_list, axis=1), jnp.stack(sbr_list, axis=1)


def tsmixer_forward(prep, past_covariates, future_covariates, static_covariates=None):
    b = past_covariates.shape[0]
    if static_covariates is None:
        static_covariates = jnp.zeros((b, prep["num_static"]), jnp.float32)
    sb1, sbr = _static_bias_stacks(static_covariates, prep["static_stages"])
    return _fused_forward(past_covariates.astype(jnp.float32),
                          future_covariates.astype(jnp.float32),
                          sb1, sbr, prep)


# ----------------------------- parameter init (PyTorch-style) -----------------------------

def _linear_init(key, fan_in, fan_out):
    k1, k2 = jax.random.split(key)
    bound = 1.0 / (max(fan_in, 1) ** 0.5)
    w = jax.random.uniform(k1, (fan_in, fan_out), jnp.float32, -bound, bound)
    b = jax.random.uniform(k2, (fan_out,), jnp.float32, -bound, bound)
    return w, b   # stored as (in, out): y = x @ w + b


def _make_cfm(key, num_features, num_static, hidden_dim, fc_dim, out_features):
    hd = hidden_dim if hidden_dim is not None else num_features
    ks = jax.random.split(key, 4)
    sw, sb = _linear_init(ks[0], num_static, hd)
    fin = num_features + hd
    w1, b1 = _linear_init(ks[1], fin, fc_dim)
    w2, b2 = _linear_init(ks[2], fc_dim, out_features)
    wr, br = _linear_init(ks[3], fin, out_features)
    return dict(static_w=sw, static_b=sb, w1=w1, b1=b1, w2=w2, b2=b2, wr=wr, br=br)


def _make_block(key, input_len, num_features, num_static, hidden_dim, fc_dim, out_features):
    k1, k2 = jax.random.split(key)
    tw, tb = _linear_init(k1, input_len, input_len)
    feat = _make_cfm(k2, num_features, num_static, hidden_dim, fc_dim, out_features)
    return dict(time_w=tw, time_b=tb, feat=feat)


def make_params(key, *, ctxt_seq_len, tgt_seq_len, num_feat, num_future_feat,
                num_static_real_feat, hidden_dim=None, fc_dim=512,
                num_blocks=4, output_dim=None):
    hidden_dim = hidden_dim or num_feat
    keys = jax.random.split(key, 4 + num_blocks)
    pw, pb = _linear_init(keys[0], ctxt_seq_len, tgt_seq_len)
    past_mixer = _make_cfm(keys[1], num_feat, num_static_real_feat, None, fc_dim, hidden_dim)
    future_mixer = _make_cfm(keys[2], num_future_feat, num_static_real_feat, hidden_dim,
                             fc_dim, hidden_dim)
    blocks = []
    for i in range(num_blocks):
        nf = 2 * hidden_dim if i == 0 else hidden_dim
        blocks.append(_make_block(keys[3 + i], tgt_seq_len, nf, num_static_real_feat,
                                  hidden_dim, fc_dim, hidden_dim))
    params = dict(past_proj=dict(w=pw, b=pb), past_mixer=past_mixer,
                  future_mixer=future_mixer, blocks=blocks,
                  num_static=num_static_real_feat, fc=None)
    if output_dim is not None:
        k1, k2 = jax.random.split(keys[3 + num_blocks])
        w1, b1 = _linear_init(k1, hidden_dim, fc_dim)
        w2, b2 = _linear_init(k2, fc_dim, output_dim)
        params["fc"] = dict(w1=w1, b1=b1, w2=w2, b2=b2)
    return params


# ----------------------------- inference-time folding / packing -----------------------------

def _prep_cfm(p, cdtype):
    """Fold eval-BatchNorm scale into W1, split W1/Wr into x/static rows, and stack the
    two output matmuls [W2; Wr_x] along K."""
    hs = p["static_w"].shape[1]
    f = p["w1"].shape[0] - hs
    s = _NORM_SCALE
    w1x = (s * p["w1"][:f]).astype(cdtype)                                   # (F, FC)
    wout = jnp.concatenate([p["w2"], p["wr"][:f]], axis=0).astype(cdtype)    # (FC+F, H)
    # TODO(synk): norm scale is folded into the MLP branch only (residual projection uses
    #             the un-normed concat input), matching the previously modeled semantics.
    static_part = dict(
        static_w=p["static_w"].astype(jnp.float32),
        static_b=p["static_b"].astype(jnp.float32),
        w1s=(s * p["w1"][f:]).astype(jnp.float32),
        b1=p["b1"].astype(jnp.float32),
        wrs=p["wr"][f:].astype(jnp.float32),
        brb2=(p["br"] + p["b2"]).astype(jnp.float32),
    )
    return w1x, wout, static_part


def prepare_params(params, compute_dtype=jnp.bfloat16):
    s = _NORM_SCALE
    weights = []
    static_stages = []

    # temporal projection (applied as pwT @ x in (L, F) layout)
    weights.append(params["past_proj"]["w"].T.astype(compute_dtype))              # (Lt, Lc)
    weights.append(params["past_proj"]["b"].astype(jnp.float32)[:, None])         # (Lt, 1)

    for key in ("past_mixer", "future_mixer"):
        w1x, wout, sp = _prep_cfm(params[key], compute_dtype)
        weights += [w1x, wout]
        static_stages.append(sp)

    for blk in params["blocks"]:
        weights.append((s * blk["time_w"]).T.astype(compute_dtype))               # (Lt, Lt)
        weights.append(blk["time_b"].astype(jnp.float32)[:, None])                # (Lt, 1)
        w1x, wout, sp = _prep_cfm(blk["feat"], compute_dtype)
        weights += [w1x, wout]
        static_stages.append(sp)

    hidden = params["past_mixer"]["w2"].shape[1]
    fc_dim = params["past_mixer"]["w1"].shape[1]
    tgt_seq_len = params["past_proj"]["w"].shape[1]
    has_head = params["fc"] is not None
    head_out = 0
    if has_head:
        fcp = params["fc"]
        weights += [fcp["w1"].astype(compute_dtype),
                    fcp["b1"].astype(jnp.float32)[None, :],
                    fcp["w2"].astype(compute_dtype),
                    fcp["b2"].astype(jnp.float32)[None, :]]
        head_out = fcp["w2"].shape[1]
    out_dim = head_out if has_head else hidden

    return dict(compute_dtype=compute_dtype,
                num_static=params["num_static"],
                num_blocks=len(params["blocks"]),
                has_head=has_head,
                head_out=head_out,
                out_dim=out_dim,
                hidden_dim=hidden,
                fc_dim=fc_dim,
                tgt_seq_len=tgt_seq_len,
                weights=weights,
                static_stages=static_stages)


# ----------------------------- demo -----------------------------

if __name__ == "__main__":
    key = jax.random.PRNGKey(0)
    B, L_CTXT, L_TGT = 2, 16, 8
    NUM_FEAT, NUM_FUTURE, NUM_STATIC = 4, 3, 2
    FC_DIM, NUM_BLOCKS, OUTPUT_DIM = 32, 2, 1

    kp, kd1, kd2, kd3 = jax.random.split(key, 4)
    raw_params = make_params(kp, ctxt_seq_len=L_CTXT, tgt_seq_len=L_TGT,
                             num_feat=NUM_FEAT, num_future_feat=NUM_FUTURE,
                             num_static_real_feat=NUM_STATIC, hidden_dim=None,
                             fc_dim=FC_DIM, num_blocks=NUM_BLOCKS, output_dim=OUTPUT_DIM)
    prep = prepare_params(raw_params, compute_dtype=jnp.bfloat16)

    past_covariates = jax.random.normal(kd1, (B, L_CTXT, NUM_FEAT), jnp.float32)
    future_covariates = jax.random.normal(kd2, (B, L_TGT, NUM_FUTURE), jnp.float32)
    static_covariates = jax.random.normal(kd3, (B, NUM_STATIC), jnp.float32)

    fwd = jax.jit(lambda p, f, s: tsmixer_forward(prep, p, f, s))
    out = fwd(past_covariates, future_covariates, static_covariates)
    jax.block_until_ready(out)
    assert out.shape == (B, L_TGT, OUTPUT_DIM), out.shape
    assert bool(jnp.all(jnp.isfinite(out)))
    print("KERNEL_OK")
</pallas_src>

<mosaic_0001>
module attributes {stable_mosaic.version = 11 : i64} {
  func.func @kernel(%arg0: i32, %arg1: memref<1x16x4xf32, #tpu.memory_space<vmem>>, %arg2: memref<1x8x3xf32, #tpu.memory_space<vmem>>, %arg3: memref<1x4x32xf32, #tpu.memory_space<vmem>>, %arg4: memref<1x4x4xf32, #tpu.memory_space<vmem>>, %arg5: memref<8x16xbf16, #tpu.memory_space<vmem>>, %arg6: memref<8x1xf32, #tpu.memory_space<vmem>>, %arg7: memref<4x32xbf16, #tpu.memory_space<vmem>>, %arg8: memref<36x4xbf16, #tpu.memory_space<vmem>>, %arg9: memref<3x32xbf16, #tpu.memory_space<vmem>>, %arg10: memref<35x4xbf16, #tpu.memory_space<vmem>>, %arg11: memref<8x8xbf16, #tpu.memory_space<vmem>>, %arg12: memref<8x1xf32, #tpu.memory_space<vmem>>, %arg13: memref<8x32xbf16, #tpu.memory_space<vmem>>, %arg14: memref<40x4xbf16, #tpu.memory_space<vmem>>, %arg15: memref<8x8xbf16, #tpu.memory_space<vmem>>, %arg16: memref<8x1xf32, #tpu.memory_space<vmem>>, %arg17: memref<4x32xbf16, #tpu.memory_space<vmem>>, %arg18: memref<36x4xbf16, #tpu.memory_space<vmem>>, %arg19: memref<4x32xbf16, #tpu.memory_space<vmem>>, %arg20: memref<1x32xf32, #tpu.memory_space<vmem>>, %arg21: memref<32x1xbf16, #tpu.memory_space<vmem>>, %arg22: memref<1x1xf32, #tpu.memory_space<vmem>>, %arg23: memref<1x8x1xf32, #tpu.memory_space<vmem>>) attributes {dimension_semantics = [#tpu.dimension_semantics<parallel>], iteration_bounds = array<i64: 2>, scalar_prefetch = 0 : i64, scratch_operands = 0 : i64, tpu.core_type = #tpu.core_type<tc>, window_params = [{transform_indices = @transform_0, window_bounds = array<i64: 1, 16, 4>}, {transform_indices = @transform_1, window_bounds = array<i64: 1, 8, 3>}, {transform_indices = @transform_2, window_bounds = array<i64: 1, 4, 32>}, {transform_indices = @transform_3, window_bounds = array<i64: 1, 4, 4>}, {pipeline_mode = #tpu.pipeline_mode<synchronous>, transform_indices = @transform_4, window_bounds = array<i64: 8, 16>}, {pipeline_mode = #tpu.pipeline_mode<synchronous>, transform_indices = @transform_5, window_bounds = array<i64: 8, 1>}, {pipeline_mode = #tpu.pipeline_mode<synchronous>, transform_indices = @transform_6, window_bounds = array<i64: 4, 32>}, {pipeline_mode = #tpu.pipeline_mode<synchronous>, transform_indices = @transform_7, window_bounds = array<i64: 36, 4>}, {pipeline_mode = #tpu.pipeline_mode<synchronous>, transform_indices = @transform_8, window_bounds = array<i64: 3, 32>}, {pipeline_mode = #tpu.pipeline_mode<synchronous>, transform_indices = @transform_9, window_bounds = array<i64: 35, 4>}, {pipeline_mode = #tpu.pipeline_mode<synchronous>, transform_indices = @transform_10, window_bounds = array<i64: 8, 8>}, {pipeline_mode = #tpu.pipeline_mode<synchronous>, transform_indices = @transform_11, window_bounds = array<i64: 8, 1>}, {pipeline_mode = #tpu.pipeline_mode<synchronous>, transform_indices = @transform_12, window_bounds = array<i64: 8, 32>}, {pipeline_mode = #tpu.pipeline_mode<synchronous>, transform_indices = @transform_13, window_bounds = array<i64: 40, 4>}, {pipeline_mode = #tpu.pipeline_mode<synchronous>, transform_indices = @transform_14, window_bounds = array<i64: 8, 8>}, {pipeline_mode = #tpu.pipeline_mode<synchronous>, transform_indices = @transform_15, window_bounds = array<i64: 8, 1>}, {pipeline_mode = #tpu.pipeline_mode<synchronous>, transform_indices = @transform_16, window_bounds = array<i64: 4, 32>}, {pipeline_mode = #tpu.pipeline_mode<synchronous>, transform_indices = @transform_17, window_bounds = array<i64: 36, 4>}, {pipeline_mode = #tpu.pipeline_mode<synchronous>, transform_indices = @transform_18, window_bounds = array<i64: 4, 32>}, {pipeline_mode = #tpu.pipeline_mode<synchronous>, transform_indices = @transform_19, window_bounds = array<i64: 1, 32>}, {pipeline_mode = #tpu.pipeline_mode<synchronous>, transform_indices = @transform_20, window_bounds = array<i64: 32, 1>}, {pipeline_mode = #tpu.pipeline_mode<synchronous>, transform_indices = @transform_21, window_bounds = array<i64: 1, 1>}, {transform_indices = @transform_22, window_bounds = array<i64: 1, 8, 1>}]} {
    %c0 = arith.constant 0 : index
    %c0_0 = arith.constant 0 : index
    %c0_1 = arith.constant 0 : index
    %0 = vector.load %arg3[%c0, %c0_0, %c0_1] : memref<1x4x32xf32, #tpu.memory_space<vmem>>, vector<1x4x32xf32>
    %1 = vector.shape_cast %0 : vector<1x4x32xf32> to vector<4x32xf32>
    %c0_2 = arith.constant 0 : index
    %c0_3 = arith.constant 0 : index
    %c0_4 = arith.constant 0 : index
    %2 = vector.load %arg4[%c0_2, %c0_3, %c0_4] : memref<1x4x4xf32, #tpu.memory_space<vmem>>, vector<1x4x4xf32>
    %3 = vector.shape_cast %2 : vector<1x4x4xf32> to vector<4x4xf32>
    %c0_5 = arith.constant 0 : index
    %c0_6 = arith.constant 0 : index
    %c0_7 = arith.constant 0 : index
    %4 = vector.load %arg1[%c0_5, %c0_6, %c0_7] : memref<1x16x4xf32, #tpu.memory_space<vmem>>, vector<1x16x4xf32>
    %5 = vector.shape_cast %4 : vector<1x16x4xf32> to vector<16x4xf32>
    %6 = arith.truncf %5 : vector<16x4xf32> to vector<16x4xbf16>
    %c0_8 = arith.constant 0 : index
    %c0_9 = arith.constant 0 : index
    %7 = vector.load %arg5[%c0_8, %c0_9] : memref<8x16xbf16, #tpu.memory_space<vmem>>, vector<8x16xbf16>
    %cst = arith.constant dense<0.000000e+00> : vector<8x4xf32>
    %8 = tpu.matmul %7, %6, %cst {dimension_numbers = #tpu.dot_dimension_numbers<[1], [0], [0], [1], [0, 0, 1, 1], [], []>} : vector<8x16xbf16>, vector<16x4xbf16>, vector<8x4xf32> -> vector<8x4xf32>
    %c0_10 = arith.constant 0 : index
    %c0_11 = arith.constant 0 : index
    %9 = vector.load %arg6[%c0_10, %c0_11] : memref<8x1xf32, #tpu.memory_space<vmem>>, vector<8x1xf32>
    %10 = vector.broadcast %9 : vector<8x1xf32> to vector<8x4xf32>
    %11 = arith.addf %8, %10 : vector<8x4xf32>
    %12 = arith.truncf %11 : vector<8x4xf32> to vector<8x4xbf16>
    %13 = vector.extract_strided_slice %1 {offsets = [0, 0], sizes = [1, 32], strides = [1, 1]} : vector<4x32xf32> to vector<1x32xf32>
    %14 = vector.extract_strided_slice %3 {offsets = [0, 0], sizes = [1, 4], strides = [1, 1]} : vector<4x4xf32> to vector<1x4xf32>
    %c0_12 = arith.constant 0 : index
    %c0_13 = arith.constant 0 : index
    %15 = vector.load %arg7[%c0_12, %c0_13] : memref<4x32xbf16, #tpu.memory_space<vmem>>, vector<4x32xbf16>
    %cst_14 = arith.constant dense<0.000000e+00> : vector<8x32xf32>
    %16 = tpu.matmul %12, %15, %cst_14 {dimension_numbers = #tpu.dot_dimension_numbers<[1], [0], [0], [1], [0, 0, 1, 1], [], []>} : vector<8x4xbf16>, vector<4x32xbf16>, vector<8x32xf32> -> vector<8x32xf32>
    %17 = vector.broadcast %13 : vector<1x32xf32> to vector<8x32xf32>
    %18 = arith.addf %16, %17 : vector<8x32xf32>
    %cst_15 = arith.constant 0.000000e+00 : f32
    %19 = vector.broadcast %cst_15 : f32 to vector<8x32xf32>
    %20 = arith.maximumf %18, %19 : vector<8x32xf32>
    %21 = arith.truncf %20 : vector<8x32xf32> to vector<8x32xbf16>
    %22 = tpu.concatenate %21, %12 in 1 : vector<8x32xbf16>, vector<8x4xbf16> -> vector<8x36xbf16>
    %c0_16 = arith.constant 0 : index
    %c0_17 = arith.constant 0 : index
    %23 = vector.load %arg8[%c0_16, %c0_17] : memref<36x4xbf16, #tpu.memory_space<vmem>>, vector<36x4xbf16>
    %cst_18 = arith.constant dense<0.000000e+00> : vector<8x4xf32>
    %24 = tpu.matmul %22, %23, %cst_18 {dimension_numbers = #tpu.dot_dimension_numbers<[1], [0], [0], [1], [0, 0, 1, 1], [], []>} : vector<8x36xbf16>, vector<36x4xbf16>, vector<8x4xf32> -> vector<8x4xf32>
    %25 = vector.broadcast %14 : vector<1x4xf32> to vector<8x4xf32>
    %26 = arith.addf %24, %25 : vector<8x4xf32>
    %c0_19 = arith.constant 0 : index
    %c0_20 = arith.constant 0 : index
    %c0_21 = arith.constant 0 : index
    %27 = vector.load %arg2[%c0_19, %c0_20, %c0_21] : memref<1x8x3xf32, #tpu.memory_space<vmem>>, vector<1x8x3xf32>
    %28 = vector.shape_cast %27 : vector<1x8x3xf32> to vector<8x3xf32>
    %29 = arith.truncf %28 : vector<8x3xf32> to vector<8x3xbf16>
    %30 = vector.extract_strided_slice %1 {offsets = [1, 0], sizes = [1, 32], strides = [1, 1]} : vector<4x32xf32> to vector<1x32xf32>
    %31 = vector.extract_strided_slice %3 {offsets = [1, 0], sizes = [1, 4], strides = [1, 1]} : vector<4x4xf32> to vector<1x4xf32>
    %c0_22 = arith.constant 0 : index
    %c0_23 = arith.constant 0 : index
    %32 = vector.load %arg9[%c0_22, %c0_23] : memref<3x32xbf16, #tpu.memory_space<vmem>>, vector<3x32xbf16>
    %cst_24 = arith.constant dense<0.000000e+00> : vector<8x32xf32>
    %33 = tpu.matmul %29, %32, %cst_24 {dimension_numbers = #tpu.dot_dimension_numbers<[1], [0], [0], [1], [0, 0, 1, 1], [], []>} : vector<8x3xbf16>, vector<3x32xbf16>, vector<8x32xf32> -> vector<8x32xf32>
    %34 = vector.broadcast %30 : vector<1x32xf32> to vector<8x32xf32>
    %35 = arith.addf %33, %34 : vector<8x32xf32>
    %cst_25 = arith.constant 0.000000e+00 : f32
    %36 = vector.broadcast %cst_25 : f32 to vector<8x32xf32>
    %37 = arith.maximumf %35, %36 : vector<8x32xf32>
    %38 = arith.truncf %37 : vector<8x32xf32> to vector<8x32xbf16>
    %39 = tpu.concatenate %38, %29 in 1 : vector<8x32xbf16>, vector<8x3xbf16> -> vector<8x35xbf16>
    %c0_26 = arith.constant 0 : index
    %c0_27 = arith.constant 0 : index
    %40 = vector.load %arg10[%c0_26, %c0_27] : memref<35x4xbf16, #tpu.memory_space<vmem>>, vector<35x4xbf16>
    %cst_28 = arith.constant dense<0.000000e+00> : vector<8x4xf32>
    %41 = tpu.matmul %39, %40, %cst_28 {dimension_numbers = #tpu.dot_dimension_numbers<[1], [0], [0], [1], [0, 0, 1, 1], [], []>} : vector<8x35xbf16>, vector<35x4xbf16>, vector<8x4xf32> -> vector<8x4xf32>
    %42 = vector.broadcast %31 : vector<1x4xf32> to vector<8x4xf32>
    %43 = arith.addf %41, %42 : vector<8x4xf32>
    %44 = tpu.concatenate %26, %43 in 1 : vector<8x4xf32>, vector<8x4xf32> -> vector<8x8xf32>
    %45 = arith.truncf %44 : vector<8x8xf32> to vector<8x8xbf16>
    %c0_29 = arith.constant 0 : index
    %c0_30 = arith.constant 0 : index
    %46 = vector.load %arg11[%c0_29, %c0_30] : memref<8x8xbf16, #tpu.memory_space<vmem>>, vector<8x8xbf16>
    %cst_31 = arith.constant dense<0.000000e+00> : vector<8x8xf32>
    %47 = tpu.matmul %46, %45, %cst_31 {dimension_numbers = #tpu.dot_dimension_numbers<[1], [0], [0], [1], [0, 0, 1, 1], [], []>} : vector<8x8xbf16>, vector<8x8xbf16>, vector<8x8xf32> -> vector<8x8xf32>
    %c0_32 = arith.constant 0 : index
    %c0_33 = arith.constant 0 : index
    %48 = vector.load %arg12[%c0_32, %c0_33] : memref<8x1xf32, #tpu.memory_space<vmem>>, vector<8x1xf32>
    %49 = vector.broadcast %48 : vector<8x1xf32> to vector<8x8xf32>
    %50 = arith.addf %47, %49 : vector<8x8xf32>
    %cst_34 = arith.constant 0.000000e+00 : f32
    %51 = vector.broadcast %cst_34 : f32 to vector<8x8xf32>
    %52 = arith.maximumf %50, %51 : vector<8x8xf32>
    %53 = arith.addf %52, %44 : vector<8x8xf32>
    %54 = arith.truncf %53 : vector<8x8xf32> to vector<8x8xbf16>
    %55 = vector.extract_strided_slice %1 {offsets = [2, 0], sizes = [1, 32], strides = [1, 1]} : vector<4x32xf32> to vector<1x32xf32>
    %56 = vector.extract_strided_slice %3 {offsets = [2, 0], sizes = [1, 4], strides = [1, 1]} : vector<4x4xf32> to vector<1x4xf32>
    %c0_35 = arith.constant 0 : index
    %c0_36 = arith.constant 0 : index
    %57 = vector.load %arg13[%c0_35, %c0_36] : memref<8x32xbf16, #tpu.memory_space<vmem>>, vector<8x32xbf16>
    %cst_37 = arith.constant dense<0.000000e+00> : vector<8x32xf32>
    %58 = tpu.matmul %54, %57, %cst_37 {dimension_numbers = #tpu.dot_dimension_numbers<[1], [0], [0], [1], [0, 0, 1, 1], [], []>} : vector<8x8xbf16>, vector<8x32xbf16>, vector<8x32xf32> -> vector<8x32xf32>
    %59 = vector.broadcast %55 : vector<1x32xf32> to vector<8x32xf32>
    %60 = arith.addf %58, %59 : vector<8x32xf32>
    %cst_38 = arith.constant 0.000000e+00 : f32
    %61 = vector.broadcast %cst_38 : f32 to vector<8x32xf32>
    %62 = arith.maximumf %60, %61 : vector<8x32xf32>
    %63 = arith.truncf %62 : vector<8x32xf32> to vector<8x32xbf16>
    %64 = tpu.concatenate %63, %54 in 1 : vector<8x32xbf16>, vector<8x8xbf16> -> vector<8x40xbf16>
    %c0_39 = arith.constant 0 : index
    %c0_40 = arith.constant 0 : index
    %65 = vector.load %arg14[%c0_39, %c0_40] : memref<40x4xbf16, #tpu.memory_space<vmem>>, vector<40x4xbf16>
    %cst_41 = arith.constant dense<0.000000e+00> : vector<8x4xf32>
    %66 = tpu.matmul %64, %65, %cst_41 {dimension_numbers = #tpu.dot_dimension_numbers<[1], [0], [0], [1], [0, 0, 1, 1], [], []>} : vector<8x40xbf16>, vector<40x4xbf16>, vector<8x4xf32> -> vector<8x4xf32>
    %67 = vector.broadcast %56 : vector<1x4xf32> to vector<8x4xf32>
    %68 = arith.addf %66, %67 : vector<8x4xf32>
    %69 = arith.truncf %68 : vector<8x4xf32> to vector<8x4xbf16>
    %c0_42 = arith.constant 0 : index
    %c0_43 = arith.constant 0 : index
    %70 = vector.load %arg15[%c0_42, %c0_43] : memref<8x8xbf16, #tpu.memory_space<vmem>>, vector<8x8xbf16>
    %cst_44 = arith.constant dense<0.000000e+00> : vector<8x4xf32>
    %71 = tpu.matmul %70, %69, %cst_44 {dimension_numbers = #tpu.dot_dimension_numbers<[1], [0], [0], [1], [0, 0, 1, 1], [], []>} : vector<8x8xbf16>, vector<8x4xbf16>, vector<8x4xf32> -> vector<8x4xf32>
    %c0_45 = arith.constant 0 : index
    %c0_46 = arith.constant 0 : index
    %72 = vector.load %arg16[%c0_45, %c0_46] : memref<8x1xf32, #tpu.memory_space<vmem>>, vector<8x1xf32>
    %73 = vector.broadcast %72 : vector<8x1xf32> to vector<8x4xf32>
    %74 = arith.addf %71, %73 : vector<8x4xf32>
    %cst_47 = arith.constant 0.000000e+00 : f32
    %75 = vector.broadcast %cst_47 : f32 to vector<8x4xf32>
    %76 = arith.maximumf %74, %75 : vector<8x4xf32>
    %77 = arith.addf %76, %68 : vector<8x4xf32>
    %78 = arith.truncf %77 : vector<8x4xf32> to vector<8x4xbf16>
    %79 = vector.extract_strided_slice %1 {offsets = [3, 0], sizes = [1, 32], strides = [1, 1]} : vector<4x32xf32> to vector<1x32xf32>
    %80 = vector.extract_strided_slice %3 {offsets = [3, 0], sizes = [1, 4], strides = [1, 1]} : vector<4x4xf32> to vector<1x4xf32>
    %c0_48 = arith.constant 0 : index
    %c0_49 = arith.constant 0 : index
    %81 = vector.load %arg17[%c0_48, %c0_49] : memref<4x32xbf16, #tpu.memory_space<vmem>>, vector<4x32xbf16>
    %cst_50 = arith.constant dense<0.000000e+00> : vector<8x32xf32>
    %82 = tpu.matmul %78, %81, %cst_50 {dimension_numbers = #tpu.dot_dimension_numbers<[1], [0], [0], [1], [0, 0, 1, 1], [], []>} : vector<8x4xbf16>, vector<4x32xbf16>, vector<8x32xf32> -> vector<8x32xf32>
    %83 = vector.broadcast %79 : vector<1x32xf32> to vector<8x32xf32>
    %84 = arith.addf %82, %83 : vector<8x32xf32>
    %cst_51 = arith.constant 0.000000e+00 : f32
    %85 = vector.broadcast %cst_51 : f32 to vector<8x32xf32>
    %86 = arith.maximumf %84, %85 : vector<8x32xf32>
    %87 = arith.truncf %86 : vector<8x32xf32> to vector<8x32xbf16>
    %88 = tpu.concatenate %87, %78 in 1 : vector<8x32xbf16>, vector<8x4xbf16> -> vector<8x36xbf16>
    %c0_52 = arith.constant 0 : index
    %c0_53 = arith.constant 0 : index
    %89 = vector.load %arg18[%c0_52, %c0_53] : memref<36x4xbf16, #tpu.memory_space<vmem>>, vector<36x4xbf16>
    %cst_54 = arith.constant dense<0.000000e+00> : vector<8x4xf32>
    %90 = tpu.matmul %88, %89, %cst_54 {dimension_numbers = #tpu.dot_dimension_numbers<[1], [0], [0], [1], [0, 0, 1, 1], [], []>} : vector<8x36xbf16>, vector<36x4xbf16>, vector<8x4xf32> -> vector<8x4xf32>
    %91 = vector.broadcast %80 : vector<1x4xf32> to vector<8x4xf32>
    %92 = arith.addf %90, %91 : vector<8x4xf32>
    %93 = arith.truncf %92 : vector<8x4xf32> to vector<8x4xbf16>
    %c0_55 = arith.constant 0 : index
    %c0_56 = arith.constant 0 : index
    %94 = vector.load %arg19[%c0_55, %c0_56] : memref<4x32xbf16, #tpu.memory_space<vmem>>, vector<4x32xbf16>
    %cst_57 = arith.constant dense<0.000000e+00> : vector<8x32xf32>
    %95 = tpu.matmul %93, %94, %cst_57 {dimension_numbers = #tpu.dot_dimension_numbers<[1], [0], [0], [1], [0, 0, 1, 1], [], []>} : vector<8x4xbf16>, vector<4x32xbf16>, vector<8x32xf32> -> vector<8x32xf32>
    %c0_58 = arith.constant 0 : index
    %c0_59 = arith.constant 0 : index
    %96 = vector.load %arg20[%c0_58, %c0_59] : memref<1x32xf32, #tpu.memory_space<vmem>>, vector<1x32xf32>
    %97 = vector.broadcast %96 : vector<1x32xf32> to vector<8x32xf32>
    %98 = arith.addf %95, %97 : vector<8x32xf32>
    %cst_60 = arith.constant 0.000000e+00 : f32
    %99 = vector.broadcast %cst_60 : f32 to vector<8x32xf32>
    %100 = arith.maximumf %98, %99 : vector<8x32xf32>
    %101 = arith.truncf %100 : vector<8x32xf32> to vector<8x32xbf16>
    %c0_61 = arith.constant 0 : index
    %c0_62 = arith.constant 0 : index
    %102 = vector.load %arg21[%c0_61, %c0_62] : memref<32x1xbf16, #tpu.memory_space<vmem>>, vector<32x1xbf16>
    %cst_63 = arith.constant dense<0.000000e+00> : vector<8x1xf32>
    %103 = tpu.matmul %101, %102, %cst_63 {dimension_numbers = #tpu.dot_dimension_numbers<[1], [0], [0], [1], [0, 0, 1, 1], [], []>} : vector<8x32xbf16>, vector<32x1xbf16>, vector<8x1xf32> -> vector<8x1xf32>
    %c0_64 = arith.constant 0 : index
    %c0_65 = arith.constant 0 : index
    %104 = vector.load %arg22[%c0_64, %c0_65] : memref<1x1xf32, #tpu.memory_space<vmem>>, vector<1x1xf32>
    %105 = vector.broadcast %104 : vector<1x1xf32> to vector<8x1xf32>
    %106 = arith.addf %103, %105 : vector<8x1xf32>
    %c0_66 = arith.constant 0 : index
    %c0_67 = arith.constant 0 : index
    %c0_68 = arith.constant 0 : index
    %107 = vector.load %arg23[%c0_66, %c0_67, %c0_68] : memref<1x8x1xf32, #tpu.memory_space<vmem>>, vector<1x8x1xf32>
    %108 = vector.shape_cast %107 : vector<1x8x1xf32> to vector<8x1xf32>
    %109 = vector.shape_cast %106 : vector<8x1xf32> to vector<1x8x1xf32>
    tpu.vector_store %arg23[%c0_66, %c0_67, %c0_68], %109 {strides = array<i32>} : memref<1x8x1xf32, #tpu.memory_space<vmem>>, vector<1x8x1xf32>,
    return
  }
  func.func @transform_0(%arg0: i32) -> (i32, i32, i32) {
    %c0_i32 = arith.constant 0 : i32
    %c0_i32_0 = arith.constant 0 : i32
    %c0_i32_1 = arith.constant 0 : i32
    return %arg0, %c0_i32, %c0_i32_0 : i32, i32, i32
  }
  func.func @transform_1(%arg0: i32) -> (i32, i32, i32) {
    %c0_i32 = arith.constant 0 : i32
    %c0_i32_0 = arith.constant 0 : i32
    %c0_i32_1 = arith.constant 0 : i32
    return %arg0, %c0_i32, %c0_i32_0 : i32, i32, i32
  }
  func.func @transform_2(%arg0: i32) -> (i32, i32, i32) {
    %c0_i32 = arith.constant 0 : i32
    %c0_i32_0 = arith.constant 0 : i32
    %c0_i32_1 = arith.constant 0 : i32
    return %arg0, %c0_i32, %c0_i32_0 : i32, i32, i32
  }
  func.func @transform_3(%arg0: i32) -> (i32, i32, i32) {
    %c0_i32 = arith.constant 0 : i32
    %c0_i32_0 = arith.constant 0 : i32
    %c0_i32_1 = arith.constant 0 : i32
    return %arg0, %c0_i32, %c0_i32_0 : i32, i32, i32
  }
  func.func @transform_4(%arg0: i32) -> (i32, i32) {
    %c0_i32 = arith.constant 0 : i32
    %c0_i32_0 = arith.constant 0 : i32
    %c0_i32_1 = arith.constant 0 : i32
    return %c0_i32, %c0_i32_0 : i32, i32
  }
  func.func @transform_5(%arg0: i32) -> (i32, i32) {
    %c0_i32 = arith.constant 0 : i32
    %c0_i32_0 = arith.constant 0 : i32
    %c0_i32_1 = arith.constant 0 : i32
    return %c0_i32, %c0_i32_0 : i32, i32
  }
  func.func @transform_6(%arg0: i32) -> (i32, i32) {
    %c0_i32 = arith.constant 0 : i32
    %c0_i32_0 = arith.constant 0 : i32
    %c0_i32_1 = arith.constant 0 : i32
    return %c0_i32, %c0_i32_0 : i32, i32
  }
  func.func @transform_7(%arg0: i32) -> (i32, i32) {
    %c0_i32 = arith.constant 0 : i32
    %c0_i32_0 = arith.constant 0 : i32
    %c0_i32_1 = arith.constant 0 : i32
    return %c0_i32, %c0_i32_0 : i32, i32
  }
  func.func @transform_8(%arg0: i32) -> (i32, i32) {
    %c0_i32 = arith.constant 0 : i32
    %c0_i32_0 = arith.constant 0 : i32
    %c0_i32_1 = arith.constant 0 : i32
    return %c0_i32, %c0_i32_0 : i32, i32
  }
  func.func @transform_9(%arg0: i32) -> (i32, i32) {
    %c0_i32 = arith.constant 0 : i32
    %c0_i32_0 = arith.constant 0 : i32
    %c0_i32_1 = arith.constant 0 : i32
    return %c0_i32, %c0_i32_0 : i32, i32
  }
  func.func @transform_10(%arg0: i32) -> (i32, i32) {
    %c0_i32 = arith.constant 0 : i32
    %c0_i32_0 = arith.constant 0 : i32
    %c0_i32_1 = arith.constant 0 : i32
    return %c0_i32, %c0_i32_0 : i32, i32
  }
  func.func @transform_11(%arg0: i32) -> (i32, i32) {
    %c0_i32 = arith.constant 0 : i32
    %c0_i32_0 = arith.constant 0 : i32
    %c0_i32_1 = arith.constant 0 : i32
    return %c0_i32, %c0_i32_0 : i32, i32
  }
  func.func @transform_12(%arg0: i32) -> (i32, i32) {
    %c0_i32 = arith.constant 0 : i32
    %c0_i32_0 = arith.constant 0 : i32
    %c0_i32_1 = arith.constant 0 : i32
    return %c0_i32, %c0_i32_0 : i32, i32
  }
  func.func @transform_13(%arg0: i32) -> (i32, i32) {
    %c0_i32 = arith.constant 0 : i32
    %c0_i32_0 = arith.constant 0 : i32
    %c0_i32_1 = arith.constant 0 : i32
    return %c0_i32, %c0_i32_0 : i32, i32
  }
  func.func @transform_14(%arg0: i32) -> (i32, i32) {
    %c0_i32 = arith.constant 0 : i32
    %c0_i32_0 = arith.constant 0 : i32
    %c0_i32_1 = arith.constant 0 : i32
    return %c0_i32, %c0_i32_0 : i32, i32
  }
  func.func @transform_15(%arg0: i32) -> (i32, i32) {
    %c0_i32 = arith.constant 0 : i32
    %c0_i32_0 = arith.constant 0 : i32
    %c0_i32_1 = arith.constant 0 : i32
    return %c0_i32, %c0_i32_0 : i32, i32
  }
  func.func @transform_16(%arg0: i32) -> (i32, i32) {
    %c0_i32 = arith.constant 0 : i32
    %c0_i32_0 = arith.constant 0 : i32
    %c0_i32_1 = arith.constant 0 : i32
    return %c0_i32, %c0_i32_0 : i32, i32
  }
  func.func @transform_17(%arg0: i32) -> (i32, i32) {
    %c0_i32 = arith.constant 0 : i32
    %c0_i32_0 = arith.constant 0 : i32
    %c0_i32_1 = arith.constant 0 : i32
    return %c0_i32, %c0_i32_0 : i32, i32
  }
  func.func @transform_18(%arg0: i32) -> (i32, i32) {
    %c0_i32 = arith.constant 0 : i32
    %c0_i32_0 = arith.constant 0 : i32
    %c0_i32_1 = arith.constant 0 : i32
    return %c0_i32, %c0_i32_0 : i32, i32
  }
  func.func @transform_19(%arg0: i32) -> (i32, i32) {
    %c0_i32 = arith.constant 0 : i32
    %c0_i32_0 = arith.constant 0 : i32
    %c0_i32_1 = arith.constant 0 : i32
    return %c0_i32, %c0_i32_0 : i32, i32
  }
  func.func @transform_20(%arg0: i32) -> (i32, i32) {
    %c0_i32 = arith.constant 0 : i32
    %c0_i32_0 = arith.constant 0 : i32
    %c0_i32_1 = arith.constant 0 : i32
    return %c0_i32, %c0_i32_0 : i32, i32
  }
  func.func @transform_21(%arg0: i32) -> (i32, i32) {
    %c0_i32 = arith.constant 0 : i32
    %c0_i32_0 = arith.constant 0 : i32
    %c0_i32_1 = arith.constant 0 : i32
    return %c0_i32, %c0_i32_0 : i32, i32
  }
  func.func @transform_22(%arg0: i32) -> (i32, i32, i32) {
    %c0_i32 = arith.constant 0 : i32
    %c0_i32_0 = arith.constant 0 : i32
    %c0_i32_1 = arith.constant 0 : i32
    return %arg0, %c0_i32, %c0_i32_0 : i32, i32, i32
  }
}

</mosaic_0001>

<llo_original>
// kernel: _lambda_.1
$region0: #{_lambda_.1}
  #allocation0 [shape = 'u32[]', space=smem, size = 0x4, offset = 0x4, fixed_abs, tag = 'smem constant byte address 0x4 - core index']
  #allocation1 [shape = 'u32[144,128]{1,0:T(1,128)}', space=vmem, size = 0x12000, scoped, tag = 'internal scratch']
  #allocation2 [shape = 'f32[1,1]{1,0:T(1,128)S(1)}', space=vmem, size = 0x200, scoped, tag = 'scoped memory for _lambda_.1']
  %s0 = inlined_call_operand.hbm [shape: f32[2,16,4], index: 0, kind: input, shape index: {}]
  %s1 = inlined_call_operand.hbm [shape: f32[2,8,3], index: 1, kind: input, shape index: {}]
  %s2 = inlined_call_operand.hbm [shape: f32[2,4,32], index: 2, kind: input, shape index: {}]
  %s3 = inlined_call_operand.hbm [shape: f32[2,4,4], index: 3, kind: input, shape index: {}]
  %s4 = inlined_call_operand.hbm [shape: bf16[8,16], index: 4, kind: input, shape index: {}]
  %s5 = inlined_call_operand.hbm [shape: f32[8,1], index: 5, kind: input, shape index: {}]
  %s6 = inlined_call_operand.hbm [shape: bf16[4,32], index: 6, kind: input, shape index: {}]
  %s7 = inlined_call_operand.hbm [shape: bf16[36,4], index: 7, kind: input, shape index: {}]
  %s8 = inlined_call_operand.hbm [shape: bf16[3,32], index: 8, kind: input, shape index: {}]
  %s9 = inlined_call_operand.hbm [shape: bf16[35,4], index: 9, kind: input, shape index: {}]
  %s10 = inlined_call_operand.hbm [shape: bf16[8,8], index: 10, kind: input, shape index: {}]
  %s11 = inlined_call_operand.hbm [shape: f32[8,1], index: 11, kind: input, shape index: {}]
  %s12 = inlined_call_operand.hbm [shape: bf16[8,32], index: 12, kind: input, shape index: {}]
  %s13 = inlined_call_operand.hbm [shape: bf16[40,4], index: 13, kind: input, shape index: {}]
  %s14 = inlined_call_operand.hbm [shape: bf16[8,8], index: 14, kind: input, shape index: {}]
  %s15 = inlined_call_operand.hbm [shape: f32[8,1], index: 15, kind: input, shape index: {}]
  %s16 = inlined_call_operand.hbm [shape: bf16[4,32], index: 16, kind: input, shape index: {}]
  %s17 = inlined_call_operand.hbm [shape: bf16[36,4], index: 17, kind: input, shape index: {}]
  %s18 = inlined_call_operand.hbm [shape: bf16[4,32], index: 18, kind: input, shape index: {}]
  %s19 = inlined_call_operand.hbm [shape: f32[1,32], index: 19, kind: input, shape index: {}]
  %s20 = inlined_call_operand.hbm [shape: bf16[32,1], index: 20, kind: input, shape index: {}]
  %s21 = inlined_call_operand.<no memory space> [shape: f32[1,1], index: 21, kind: input, shape index: {}]
  %s22 = inlined_call_operand.hbm [shape: f32[2,8,1], index: 22, kind: output, shape index: {}]
  %s23 = sld [smem:[#allocation0]]
  $region205: #{_lambda_.1} parent=0
    _
  %s25 = ssub.s32 1, %s23
  %s26 = scalar_select 0, %s25, %s23
  %v27 = vstv %s21
  %28 = vst [vmem:[#allocation2] sm:$0x1] %v27
  $region1: #{_lambda_.1} parent=0
    #allocation3 [shape = 'u8[16384]{0}', space=vmem, size = 0x4000, scoped, tag = 'input window, operand 0']
    #allocation4 [shape = 's32[2]{0}', space=sflag, size = 0x8, scoped, tag = 'scoped memory for _lambda_.1']
    #allocation5 [shape = 's32[2]{0}', space=sflag, size = 0x8, scoped, tag = 'scoped memory for _lambda_.1']
    #allocation6 [shape = 'u8[8192]{0}', space=vmem, size = 0x2000, scoped, tag = 'input window, operand 1']
    #allocation7 [shape = 's32[2]{0}', space=sflag, size = 0x8, scoped, tag = 'scoped memory for _lambda_.1']
    #allocation8 [shape = 'u8[4096]{0}', space=vmem, size = 0x1000, scoped, tag = 'input window, operand 2']
    #allocation9 [shape = 'u8[4096]{0}', space=vmem, size = 0x1000, scoped, tag = 'input window, operand 3']
    #allocation10 [shape = 's32[2]{0}', space=sflag, size = 0x8, scoped, tag = 'scoped memory for _lambda_.1']
    #allocation11 [shape = 'u8[2048]{0}', space=vmem, size = 0x800, scoped, tag = 'input window, operand 4, single buffered']
    #allocation12 [shape = 'u8[4096]{0}', space=vmem, size = 0x1000, scoped, tag = 'input window, operand 5, single buffered']
    #allocation13 [shape = 's32[1]{0}', space=sflag, size = 0x4, scoped, tag = 'scoped memory for _lambda_.1']
    #allocation14 [shape = 'u8[1024]{0}', space=vmem, size = 0x400, scoped, tag = 'input window, operand 6, single buffered']
    #allocation15 [shape = 'u8[10240]{0}', space=vmem, size = 0x2800, scoped, tag = 'input window, operand 7, single buffered']
    #allocation16 [shape = 's32[1]{0}', space=sflag, size = 0x4, scoped, tag = 'scoped memory for _lambda_.1']
    #allocation17 [shape = 'u8[1024]{0}', space=vmem, size = 0x400, scoped, tag = 'input window, operand 8, single buffered']
    #allocation18 [shape = 'u8[10240]{0}', space=vmem, size = 0x2800, scoped, tag = 'input window, operand 9, single buffered']
    #allocation19 [shape = 's32[1]{0}', space=sflag, size = 0x4, scoped, tag = 'scoped memory for _lambda_.1']
    #allocation20 [shape = 'u8[2048]{0}', space=vmem, size = 0x800, scoped, tag = 'input window, operand 10, single buffered']
    #allocation21 [shape = 'u8[4096]{0}', space=vmem, size = 0x1000, scoped, tag = 'input window, operand 11, single buffered']
    #allocation22 [shape = 's32[1]{0}', space=sflag, size = 0x4, scoped, tag = 'scoped memory for _lambda_.1']
    #allocation23 [shape = 'u8[2048]{0}', space=vmem, size = 0x800, scoped, tag = 'input window, operand 12, single buffered']
    #allocation24 [shape = 'u8[10240]{0}', space=vmem, size = 0x2800, scoped, tag = 'input window, operand 13, single buffered']
    #allocation25 [shape = 's32[1]{0}', space=sflag, size = 0x4, scoped, tag = 'scoped memory for _lambda_.1']
    #allocation26 [shape = 'u8[2048]{0}', space=vmem, size = 0x800, scoped, tag = 'input window, operand 14, single buffered']
    #allocation27 [shape = 'u8[4096]{0}', space=vmem, size = 0x1000, scoped, tag = 'input window, operand 15, single buffered']
    #allocation28 [shape = 's32[1]{0}', space=sflag, size = 0x4, scoped, tag = 'scoped memory for _lambda_.1']
    #allocation29 [shape = 'u8[1024]{0}', space=vmem, size = 0x400, scoped, tag = 'input window, operand 16, single buffered']
    #allocation30 [shape = 'u8[10240]{0}', space=vmem, size = 0x2800, scoped, tag = 'input window, operand 17, single buffered']
    #allocation31 [shape = 's32[1]{0}', space=sflag, size = 0x4, scoped, tag = 'scoped memory for _lambda_.1']
    #allocation32 [shape = 'u8[1024]{0}', space=vmem, size = 0x400, scoped, tag = 'input window, operand 18, single buffered']
    #allocation33 [shape = 'u8[512]{0}', space=vmem, size = 0x400, scoped, tag = 'input window, operand 19, single buffered']
    #allocation34 [shape = 's32[1]{0}', space=sflag, size = 0x4, scoped, tag = 'scoped memory for _lambda_.1']
    #allocation35 [shape = 'u8[8192]{0}', space=vmem, size = 0x2000, scoped, tag = 'input window, operand 20, single buffered']
    #allocation36 [shape = 'u8[8192]{0}', space=vmem, size = 0x2000, scoped, tag = 'output window, operand 0']
    %29 = vsyncpa [#allocation4], 0
    %s30 = scalar_lea.sflag [#allocation4], 1
    %31 = vsyncpa %s30, 0
    %32 = vsyncpa [#allocation7], 0
    %s33 = scalar_lea.sflag [#allocation7], 1
    %34 = vsyncpa %s33, 0
    %35 = vsyncpa [#allocation10], 0
    %s36 = scalar_lea.sflag [#allocation10], 1
    %37 = vsyncpa %s36, 0
    %38 = vsyncpa [#allocation13], 0
    %39 = vsyncpa [#allocation16], 0
    %40 = vsyncpa [#allocation19], 0
    %41 = vsyncpa [#allocation22], 0
    %42 = vsyncpa [#allocation25], 0
    %43 = vsyncpa [#allocation28], 0
    %44 = vsyncpa [#allocation31], 0
    %45 = vsyncpa [#allocation34], 0
    %46 = vsyncpa [#allocation5], 0
    %s47 = scalar_lea.sflag [#allocation5], 1
    %48 = vsyncpa %s47, 0
    loop: start=0, step=1, limit=4
    $region2: #{_lambda_.1} parent=1 // loop_pre_header
      _
    $region3: #{_lambda_.1} parent=1 // loop_header
      %s50 = sphi 0, %s54
      %p51 = scmp.ge.s32.totalorder %s50, 4
      %s60 = sphi 0, %s62
      %s63 = sphi 0, %s60
      %s64 = sphi 0, %s63
      %s80 = sphi 0, %s64
      %s86 = sphi 0, %s88
      %s89 = sphi 0, %s86
      %s90 = sphi 0, %s89
      %s106 = sphi 0, %s90
      %s112 = sphi 0, %s114
      %s115 = sphi 0, %s112
      %s116 = sphi 0, %s115
      %s132 = sphi 0, %s116
      %s138 = sphi 0, %s140
      %s141 = sphi 0, %s138
      %s142 = sphi 0, %s141
      %s158 = sphi 0, %s142
      %s162 = sphi 0, %s162
      %s164 = sphi 0, %s162
      %s165 = sphi 0, %s164
      %s179 = sphi 0, %s165
      %s183 = sphi 0, %s183
      %s185 = sphi 0, %s183
      %s186 = sphi 0, %s185
      %s200 = sphi 0, %s186
      %s204 = sphi 0, %s204
      %s206 = sphi 0, %s204
      %s207 = sphi 0, %s206
      %s221 = sphi 0, %s207
      %s225 = sphi 0, %s225
      %s227 = sphi 0, %s225
      %s228 = sphi 0, %s227
      %s242 = sphi 0, %s228
      %s246 = sphi 0, %s246
      %s248 = sphi 0, %s246
      %s249 = sphi 0, %s248
      %s263 = sphi 0, %s249
      %s267 = sphi 0, %s267
      %s269 = sphi 0, %s267
      %s270 = sphi 0, %s269
      %s284 = sphi 0, %s270
      %s288 = sphi 0, %s288
      %s290 = sphi 0, %s288
      %s291 = sphi 0, %s290
      %s305 = sphi 0, %s291
      %s309 = sphi 0, %s309
      %s311 = sphi 0, %s309
      %s312 = sphi 0, %s311
      %s326 = sphi 0, %s312
      %s330 = sphi 0, %s330
      %s332 = sphi 0, %s330
      %s333 = sphi 0, %s332
      %s347 = sphi 0, %s333
      %s351 = sphi 0, %s351
      %s353 = sphi 0, %s351
      %s354 = sphi 0, %s353
      %s368 = sphi 0, %s354
      %s372 = sphi 0, %s372
      %s374 = sphi 0, %s372
      %s375 = sphi 0, %s374
      %s389 = sphi 0, %s375
      %s393 = sphi 0, %s393
      %s395 = sphi 0, %s393
      %s396 = sphi 0, %s395
      %s410 = sphi 0, %s396
      %s414 = sphi 0, %s414
      %s416 = sphi 0, %s414
      %s417 = sphi 0, %s416
      %s431 = sphi 0, %s417
      %s435 = sphi 0, %s435
      %s437 = sphi 0, %s435
      %s438 = sphi 0, %s437
      %s452 = sphi 0, %s438
      %s456 = sphi 0, %s456
      %s458 = sphi 0, %s456
      %s459 = sphi 0, %s458
      %s473 = sphi 0, %s459
      %s477 = sphi 0, %s477
      %s479 = sphi 0, %s477
      %s480 = sphi 0, %s479
      %s494 = sphi 0, %s480
      %s498 = sphi 0, %s498
      %s500 = sphi 0, %s498
      %s501 = sphi 0, %s500
      %s515 = sphi 0, %s501
      %s519 = sphi 0, %s519
      %s521 = sphi 0, %s519
      %s522 = sphi 0, %s521
      %s536 = sphi 0, %s522
      %s542 = sphi 0, %s544
      %s545 = sphi 0, %s542
      %s546 = sphi 0, %s545
      %s562 = sphi 0, %s546
    $region4: #{_lambda_.1} parent=1 // loop_header_branch
      %53 = sbr.rel (%p51) target = $region8
    $region5: #{_lambda_.1} parent=1 // loop_body
      %s55 = ssub.s32 %s50, 1
      %s56 = ssub.s32 %s50, 2
      %s57 = sadd.s32 %s50, 1
      %s58 = ssub.s32 %s50, %s57
      %p59 = scmp.eq.s32.totalorder %s58, 0
      %s61 = sadd.s32 %s60, 1
      %s62 = scalar_select %p59, %s60, %s61
      %p65 = pneg %p59
      %p66 = scmp.eq.s32.totalorder %s50, 1
      %p67 = por %p65, %p66
      %p68 = scmp.ne.s32.totalorder %s60, %s63
      %p69 = scmp.eq.s32.totalorder %s50, 0
      %p70 = por %p68, %p69
      %p71 = scmp.ne.s32.totalorder %s60, %s63
      %p72 = scmp.eq.s32.totalorder %s55, 1
      %p73 = por %p71, %p72
      %p74 = scmp.ne.s32.totalorder %s63, %s64
      %p75 = scmp.eq.s32.totalorder %s55, 0
      %p76 = por %p74, %p75
      %p77 = scmp.ne.s32.totalorder %s63, %s64
      %p78 = scmp.eq.s32.totalorder %s56, 1
      %p79 = por %p77, %p78
      %p81 = scmp.ne.s32.totalorder %s64, %s80
      %p82 = scmp.eq.s32.totalorder %s56, 0
      %p83 = por %p81, %p82
      %s84 = ssub.s32 %s50, %s57
      %p85 = scmp.eq.s32.totalorder %s84, 0
      %s87 = sadd.s32 %s86, 1
      %s88 = scalar_select %p85, %s86, %s87
      %p91 = pneg %p85
      %p92 = scmp.eq.s32.totalorder %s50, 1
      %p93 = por %p91, %p92
      %p94 = scmp.ne.s32.totalorder %s86, %s89
      %p95 = scmp.eq.s32.totalorder %s50, 0
      %p96 = por %p94, %p95
      %p97 = scmp.ne.s32.totalorder %s86, %s89
      %p98 = scmp.eq.s32.totalorder %s55, 1
      %p99 = por %p97, %p98
      %p100 = scmp.ne.s32.totalorder %s89, %s90
      %p101 = scmp.eq.s32.totalorder %s55, 0
      %p102 = por %p100, %p101
      %p103 = scmp.ne.s32.totalorder %s89, %s90
      %p104 = scmp.eq.s32.totalorder %s56, 1
      %p105 = por %p103, %p104
      %p107 = scmp.ne.s32.totalorder %s90, %s106
      %p108 = scmp.eq.s32.totalorder %s56, 0
      %p109 = por %p107, %p108
      %s110 = ssub.s32 %s50, %s57
      %p111 = scmp.eq.s32.totalorder %s110, 0
      %s113 = sadd.s32 %s112, 1
      %s114 = scalar_select %p111, %s112, %s113
      %p117 = pneg %p111
      %p118 = scmp.eq.s32.totalorder %s50, 1
      %p119 = por %p117, %p118
      %p120 = scmp.ne.s32.totalorder %s112, %s115
      %p121 = scmp.eq.s32.totalorder %s50, 0
      %p122 = por %p120, %p121
      %p123 = scmp.ne.s32.totalorder %s112, %s115
      %p124 = scmp.eq.s32.totalorder %s55, 1
      %p125 = por %p123, %p124
      %p126 = scmp.ne.s32.totalorder %s115, %s116
      %p127 = scmp.eq.s32.totalorder %s55, 0
      %p128 = por %p126, %p127
      %p129 = scmp.ne.s32.totalorder %s115, %s116
      %p130 = scmp.eq.s32.totalorder %s56, 1
      %p131 = por %p129, %p130
      %p133 = scmp.ne.s32.totalorder %s116, %s132
      %p134 = scmp.eq.s32.totalorder %s56, 0
      %p135 = por %p133, %p134
      %s136 = ssub.s32 %s50, %s57
      %p137 = scmp.eq.s32.totalorder %s136, 0
      %s139 = sadd.s32 %s138, 1
      %s140 = scalar_select %p137, %s138, %s139
      %p143 = pneg %p137
      %p144 = scmp.eq.s32.totalorder %s50, 1
      %p145 = por %p143, %p144
      %p146 = scmp.ne.s32.totalorder %s138, %s141
      %p147 = scmp.eq.s32.totalorder %s50, 0
      %p148 = por %p146, %p147
      %p149 = scmp.ne.s32.totalorder %s138, %s141
      %p150 = scmp.eq.s32.totalorder %s55, 1
      %p151 = por %p149, %p150
      %p152 = scmp.ne.s32.totalorder %s141, %s142
      %p153 = scmp.eq.s32.totalorder %s55, 0
      %p154 = por %p152, %p153
      %p155 = scmp.ne.s32.totalorder %s141, %s142
      %p156 = scmp.eq.s32.totalorder %s56, 1
      %p157 = por %p155, %p156
      %p159 = scmp.ne.s32.totalorder %s142, %s158
      %p160 = scmp.eq.s32.totalorder %s56, 0
      %p161 = por %p159, %p160
      %s163 = sadd.s32 %s162, 1
      %p166 = scmp.eq.s32.totalorder %s50, 1
      %p167 = scmp.ne.s32.totalorder %s162, %s164
      %p168 = scmp.eq.s32.totalorder %s50, 0
      %p169 = por %p167, %p168
      %p170 = scmp.ne.s32.totalorder %s162, %s164
      %p171 = scmp.eq.s32.totalorder %s55, 1
      %p172 = por %p170, %p171
      %p173 = scmp.ne.s32.totalorder %s164, %s165
      %p174 = scmp.eq.s32.totalorder %s55, 0
      %p175 = por %p173, %p174
      %p176 = scmp.ne.s32.totalorder %s164, %s165
      %p177 = scmp.eq.s32.totalorder %s56, 1
      %p178 = por %p176, %p177
      %p180 = scmp.ne.s32.totalorder %s165, %s179
      %p181 = scmp.eq.s32.totalorder %s56, 0
      %p182 = por %p180, %p181
      %s184 = sadd.s32 %s183, 1
      %p187 = scmp.eq.s32.totalorder %s50, 1
      %p188 = scmp.ne.s32.totalorder %s183, %s185
      %p189 = scmp.eq.s32.totalorder %s50, 0
      %p190 = por %p188, %p189
      %p191 = scmp.ne.s32.totalorder %s183, %s185
      %p192 = scmp.eq.s32.totalorder %s55, 1
      %p193 = por %p191, %p192
      %p194 = scmp.ne.s32.totalorder %s185, %s186
      %p195 = scmp.eq.s32.totalorder %s55, 0
      %p196 = por %p194, %p195
      %p197 = scmp.ne.s32.totalorder %s185, %s186
      %p198 = scmp.eq.s32.totalorder %s56, 1
      %p199 = por %p197, %p198
      %p201 = scmp.ne.s32.totalorder %s186, %s200
      %p202 = scmp.eq.s32.totalorder %s56, 0
      %p203 = por %p201, %p202
      %s205 = sadd.s32 %s204, 1
      %p208 = scmp.eq.s32.totalorder %s50, 1
      %p209 = scmp.ne.s32.totalorder %s204, %s206
      %p210 = scmp.eq.s32.totalorder %s50, 0
      %p211 = por %p209, %p210
      %p212 = scmp.ne.s32.totalorder %s204, %s206
      %p213 = scmp.eq.s32.totalorder %s55, 1
      %p214 = por %p212, %p213
      %p215 = scmp.ne.s32.totalorder %s206, %s207
      %p216 = scmp.eq.s32.totalorder %s55, 0
      %p217 = por %p215, %p216
      %p218 = scmp.ne.s32.totalorder %s206, %s207
      %p219 = scmp.eq.s32.totalorder %s56, 1
      %p220 = por %p218, %p219
      %p222 = scmp.ne.s32.totalorder %s207, %s221
      %p223 = scmp.eq.s32.totalorder %s56, 0
      %p224 = por %p222, %p223
      %s226 = sadd.s32 %s225, 1
      %p229 = scmp.eq.s32.totalorder %s50, 1
      %p230 = scmp.ne.s32.totalorder %s225, %s227
      %p231 = scmp.eq.s32.totalorder %s50, 0
      %p232 = por %p230, %p231
      %p233 = scmp.ne.s32.totalorder %s225, %s227
      %p234 = scmp.eq.s32.totalorder %s55, 1
      %p235 = por %p233, %p234
      %p236 = scmp.ne.s32.totalorder %s227, %s228
      %p237 = scmp.eq.s32.totalorder %s55, 0
      %p238 = por %p236, %p237
      %p239 = scmp.ne.s32.totalorder %s227, %s228
      %p240 = scmp.eq.s32.totalorder %s56, 1
      %p241 = por %p239, %p240
      %p243 = scmp.ne.s32.totalorder %s228, %s242
      %p244 = scmp.eq.s32.totalorder %s56, 0
      %p245 = por %p243, %p244
      %s247 = sadd.s32 %s246, 1
      %p250 = scmp.eq.s32.totalorder %s50, 1
      %p251 = scmp.ne.s32.totalorder %s246, %s248
      %p252 = scmp.eq.s32.totalorder %s50, 0
      %p253 = por %p251, %p252
      %p254 = scmp.ne.s32.totalorder %s246, %s248
      %p255 = scmp.eq.s32.totalorder %s55, 1
      %p256 = por %p254, %p255
      %p257 = scmp.ne.s32.totalorder %s248, %s249
      %p258 = scmp.eq.s32.totalorder %s55, 0
      %p259 = por %p257, %p258
      %p260 = scmp.ne.s32.totalorder %s248, %s249
      %p261 = scmp.eq.s32.totalorder %s56, 1
      %p262 = por %p260, %p261
      %p264 = scmp.ne.s32.totalorder %s249, %s263
      %p265 = scmp.eq.s32.totalorder %s56, 0
      %p266 = por %p264, %p265
      %s268 = sadd.s32 %s267, 1
      %p271 = scmp.eq.s32.totalorder %s50, 1
      %p272 = scmp.ne.s32.totalorder %s267, %s269
      %p273 = scmp.eq.s32.totalorder %s50, 0
      %p274 = por %p272, %p273
      %p275 = scmp.ne.s32.totalorder %s267, %s269
      %p276 = scmp.eq.s32.totalorder %s55, 1
      %p277 = por %p275, %p276
      %p278 = scmp.ne.s32.totalorder %s269, %s270
      %p279 = scmp.eq.s32.totalorder %s55, 0
      %p280 = por %p278, %p279
      %p281 = scmp.ne.s32.totalorder %s269, %s270
      %p282 = scmp.eq.s32.totalorder %s56, 1
      %p283 = por %p281, %p282
      %p285 = scmp.ne.s32.totalorder %s270, %s284
      %p286 = scmp.eq.s32.totalorder %s56, 0
      %p287 = por %p285, %p286
      %s289 = sadd.s32 %s288, 1
      %p292 = scmp.eq.s32.totalorder %s50, 1
      %p293 = scmp.ne.s32.totalorder %s288, %s290
      %p294 = scmp.eq.s32.totalorder %s50, 0
      %p295 = por %p293, %p294
      %p296 = scmp.ne.s32.totalorder %s288, %s290
      %p297 = scmp.eq.s32.totalorder %s55, 1
      %p298 = por %p296, %p297
      %p299 = scmp.ne.s32.totalorder %s290, %s291
      %p300 = scmp.eq.s32.totalorder %s55, 0
      %p301 = por %p299, %p300
      %p302 = scmp.ne.s32.totalorder %s290, %s291
      %p303 = scmp.eq.s32.totalorder %s56, 1
      %p304 = por %p302, %p303
      %p306 = scmp.ne.s32.totalorder %s291, %s305
      %p307 = scmp.eq.s32.totalorder %s56, 0
      %p308 = por %p306, %p307
      %s310 = sadd.s32 %s309, 1
      %p313 = scmp.eq.s32.totalorder %s50, 1
      %p314 = scmp.ne.s32.totalorder %s309, %s311
      %p315 = scmp.eq.s32.totalorder %s50, 0
      %p316 = por %p314, %p315
      %p317 = scmp.ne.s32.totalorder %s309, %s311
      %p318 = scmp.eq.s32.totalorder %s55, 1
      %p319 = por %p317, %p318
      %p320 = scmp.ne.s32.totalorder %s311, %s312
      %p321 = scmp.eq.s32.totalorder %s55, 0
      %p322 = por %p320, %p321
      %p323 = scmp.ne.s32.totalorder %s311, %s312
      %p324 = scmp.eq.s32.totalorder %s56, 1
      %p325 = por %p323, %p324
      %p327 = scmp.ne.s32.totalorder %s312, %s326
      %p328 = scmp.eq.s32.totalorder %s56, 0
      %p329 = por %p327, %p328
      %s331 = sadd.s32 %s330, 1
      %p334 = scmp.eq.s32.totalorder %s50, 1
      %p335 = scmp.ne.s32.totalorder %s330, %s332
      %p336 = scmp.eq.s32.totalorder %s50, 0
      %p337 = por %p335, %p336
      %p338 = scmp.ne.s32.totalorder %s330, %s332
      %p339 = scmp.eq.s32.totalorder %s55, 1
      %p340 = por %p338, %p339
      %p341 = scmp.ne.s32.totalorder %s332, %s333
      %p342 = scmp.eq.s32.totalorder %s55, 0
      %p343 = por %p341, %p342
      %p344 = scmp.ne.s32.totalorder %s332, %s333
      %p345 = scmp.eq.s32.totalorder %s56, 1
      %p346 = por %p344, %p345
      %p348 = scmp.ne.s32.totalorder %s333, %s347
      %p349 = scmp.eq.s32.totalorder %s56, 0
      %p350 = por %p348, %p349
      %s352 = sadd.s32 %s351, 1
      %p355 = scmp.eq.s32.totalorder %s50, 1
      %p356 = scmp.ne.s32.totalorder %s351, %s353
      %p357 = scmp.eq.s32.totalorder %s50, 0
      %p358 = por %p356, %p357
      %p359 = scmp.ne.s32.totalorder %s351, %s353
      %p360 = scmp.eq.s32.totalorder %s55, 1
      %p361 = por %p359, %p360
      %p362 = scmp.ne.s32.totalorder %s353, %s354
      %p363 = scmp.eq.s32.totalorder %s55, 0
      %p364 = por %p362, %p363
      %p365 = scmp.ne.s32.totalorder %s353, %s354
      %p366 = scmp.eq.s32.totalorder %s56, 1
      %p367 = por %p365, %p366
      %p369 = scmp.ne.s32.totalorder %s354, %s368
      %p370 = scmp.eq.s32.totalorder %s56, 0
      %p371 = por %p369, %p370
      %s373 = sadd.s32 %s372, 1
      %p376 = scmp.eq.s32.totalorder %s50, 1
      %p377 = scmp.ne.s32.totalorder %s372, %s374
      %p378 = scmp.eq.s32.totalorder %s50, 0
      %p379 = por %p377, %p378
      %p380 = scmp.ne.s32.totalorder %s372, %s374
      %p381 = scmp.eq.s32.totalorder %s55, 1
      %p382 = por %p380, %p381
      %p383 = scmp.ne.s32.totalorder %s374, %s375
      %p384 = scmp.eq.s32.totalorder %s55, 0
      %p385 = por %p383, %p384
      %p386 = scmp.ne.s32.totalorder %s374, %s375
      %p387 = scmp.eq.s32.totalorder %s56, 1
      %p388 = por %p386, %p387
      %p390 = scmp.ne.s32.totalorder %s375, %s389
      %p391 = scmp.eq.s32.totalorder %s56, 0
      %p392 = por %p390, %p391
      %s394 = sadd.s32 %s393, 1
      %p397 = scmp.eq.s32.totalorder %s50, 1
      %p398 = scmp.ne.s32.totalorder %s393, %s395
      %p399 = scmp.eq.s32.totalorder %s50, 0
      %p400 = por %p398, %p399
      %p401 = scmp.ne.s32.totalorder %s393, %s395
      %p402 = scmp.eq.s32.totalorder %s55, 1
      %p403 = por %p401, %p402
      %p404 = scmp.ne.s32.totalorder %s395, %s396
      %p405 = scmp.eq.s32.totalorder %s55, 0
      %p406 = por %p404, %p405
      %p407 = scmp.ne.s32.totalorder %s395, %s396
      %p408 = scmp.eq.s32.totalorder %s56, 1
      %p409 = por %p407, %p408
      %p411 = scmp.ne.s32.totalorder %s396, %s410
      %p412 = scmp.eq.s32.totalorder %s56, 0
      %p413 = por %p411, %p412
      %s415 = sadd.s32 %s414, 1
      %p418 = scmp.eq.s32.totalorder %s50, 1
      %p419 = scmp.ne.s32.totalorder %s414, %s416
      %p420 = scmp.eq.s32.totalorder %s50, 0
      %p421 = por %p419, %p420
      %p422 = scmp.ne.s32.totalorder %s414, %s416
      %p423 = scmp.eq.s32.totalorder %s55, 1
      %p424 = por %p422, %p423
      %p425 = scmp.ne.s32.totalorder %s416, %s417
      %p426 = scmp.eq.s32.totalorder %s55, 0
      %p427 = por %p425, %p426
      %p428 = scmp.ne.s32.totalorder %s416, %s417
      %p429 = scmp.eq.s32.totalorder %s56, 1
      %p430 = por %p428, %p429
      %p432 = scmp.ne.s32.totalorder %s417, %s431
      %p433 = scmp.eq.s32.totalorder %s56, 0
      %p434 = por %p432, %p433
      %s436 = sadd.s32 %s435, 1
      %p439 = scmp.eq.s32.totalorder %s50, 1
      %p440 = scmp.ne.s32.totalorder %s435, %s437
      %p441 = scmp.eq.s32.totalorder %s50, 0
      %p442 = por %p440, %p441
      %p443 = scmp.ne.s32.totalorder %s435, %s437
      %p444 = scmp.eq.s32.totalorder %s55, 1
      %p445 = por %p443, %p444
      %p446 = scmp.ne.s32.totalorder %s437, %s438
      %p447 = scmp.eq.s32.totalorder %s55, 0
      %p448 = por %p446, %p447
      %p449 = scmp.ne.s32.totalorder %s437, %s438
      %p450 = scmp.eq.s32.totalorder %s56, 1
      %p451 = por %p449, %p450
      %p453 = scmp.ne.s32.totalorder %s438, %s452
      %p454 = scmp.eq.s32.totalorder %s56, 0
      %p455 = por %p453, %p454
      %s457 = sadd.s32 %s456, 1
      %p460 = scmp.eq.s32.totalorder %s50, 1
      %p461 = scmp.ne.s32.totalorder %s456, %s458
      %p462 = scmp.eq.s32.totalorder %s50, 0
      %p463 = por %p461, %p462
      %p464 = scmp.ne.s32.totalorder %s456, %s458
      %p465 = scmp.eq.s32.totalorder %s55, 1
      %p466 = por %p464, %p465
      %p467 = scmp.ne.s32.totalorder %s458, %s459
      %p468 = scmp.eq.s32.totalorder %s55, 0
      %p469 = por %p467, %p468
      %p470 = scmp.ne.s32.totalorder %s458, %s459
      %p471 = scmp.eq.s32.totalorder %s56, 1
      %p472 = por %p470, %p471
      %p474 = scmp.ne.s32.totalorder %s459, %s473
      %p475 = scmp.eq.s32.totalorder %s56, 0
      %p476 = por %p474, %p475
      %s478 = sadd.s32 %s477, 1
      %p481 = scmp.eq.s32.totalorder %s50, 1
      %p482 = scmp.ne.s32.totalorder %s477, %s479
      %p483 = scmp.eq.s32.totalorder %s50, 0
      %p484 = por %p482, %p483
      %p485 = scmp.ne.s32.totalorder %s477, %s479
      %p486 = scmp.eq.s32.totalorder %s55, 1
      %p487 = por %p485, %p486
      %p488 = scmp.ne.s32.totalorder %s479, %s480
      %p489 = scmp.eq.s32.totalorder %s55, 0
      %p490 = por %p488, %p489
      %p491 = scmp.ne.s32.totalorder %s479, %s480
      %p492 = scmp.eq.s32.totalorder %s56, 1
      %p493 = por %p491, %p492
      %p495 = scmp.ne.s32.totalorder %s480, %s494
      %p496 = scmp.eq.s32.totalorder %s56, 0
      %p497 = por %p495, %p496
      %s499 = sadd.s32 %s498, 1
      %p502 = scmp.eq.s32.totalorder %s50, 1
      %p503 = scmp.ne.s32.totalorder %s498, %s500
      %p504 = scmp.eq.s32.totalorder %s50, 0
      %p505 = por %p503, %p504
      %p506 = scmp.ne.s32.totalorder %s498, %s500
      %p507 = scmp.eq.s32.totalorder %s55, 1
      %p508 = por %p506, %p507
      %p509 = scmp.ne.s32.totalorder %s500, %s501
      %p510 = scmp.eq.s32.totalorder %s55, 0
      %p511 = por %p509, %p510
      %p512 = scmp.ne.s32.totalorder %s500, %s501
      %p513 = scmp.eq.s32.totalorder %s56, 1
      %p514 = por %p512, %p513
      %p516 = scmp.ne.s32.totalorder %s501, %s515
      %p517 = scmp.eq.s32.totalorder %s56, 0
      %p518 = por %p516, %p517
      %s520 = sadd.s32 %s519, 1
      %p523 = scmp.eq.s32.totalorder %s50, 1
      %p524 = scmp.ne.s32.totalorder %s519, %s521
      %p525 = scmp.eq.s32.totalorder %s50, 0
      %p526 = por %p524, %p525
      %p527 = scmp.ne.s32.totalorder %s519, %s521
      %p528 = scmp.eq.s32.totalorder %s55, 1
      %p529 = por %p527, %p528
      %p530 = scmp.ne.s32.totalorder %s521, %s522
      %p531 = scmp.eq.s32.totalorder %s55, 0
      %p532 = por %p530, %p531
      %p533 = scmp.ne.s32.totalorder %s521, %s522
      %p534 = scmp.eq.s32.totalorder %s56, 1
      %p535 = por %p533, %p534
      %p537 = scmp.ne.s32.totalorder %s522, %s536
      %p538 = scmp.eq.s32.totalorder %s56, 0
      %p539 = por %p537, %p538
      %s540 = ssub.s32 %s50, %s57
      %p541 = scmp.eq.s32.totalorder %s540, 0
      %s543 = sadd.s32 %s542, 1
      %s544 = scalar_select %p541, %s542, %s543
      %p547 = pneg %p541
      %p548 = scmp.eq.s32.totalorder %s50, 1
      %p549 = por %p547, %p548
      %p550 = scmp.ne.s32.totalorder %s542, %s545
      %p551 = scmp.eq.s32.totalorder %s50, 0
      %p552 = por %p550, %p551
      %p553 = scmp.ne.s32.totalorder %s542, %s545
      %p554 = scmp.eq.s32.totalorder %s55, 1
      %p555 = por %p553, %p554
      %p556 = scmp.ne.s32.totalorder %s545, %s546
      %p557 = scmp.eq.s32.totalorder %s55, 0
      %p558 = por %p556, %p557
      %p559 = scmp.ne.s32.totalorder %s545, %s546
      %p560 = scmp.eq.s32.totalorder %s56, 1
      %p561 = por %p559, %p560
      %p563 = scmp.ne.s32.totalorder %s546, %s562
      %p564 = scmp.eq.s32.totalorder %s56, 0
      %p565 = por %p563, %p564
      %p566 = scmp.le.s32.totalorder 1, %s50
      %p567 = scmp.lt.s32.totalorder %s50, 3
      %p568 = pnand %p566, %p567
      %p569 = pneg %p568
      // Predicated region
      $region9: #{_lambda_.1} parent=5 // pred_check
        _
      $region10: #{_lambda_.1} parent=5 // pred_check_branch
        %571 = sbr.rel (%p568) target = $region12
      $region11: #{_lambda_.1} parent=5 // pred_region
        %s572 = ssub.s32 %s50, 1
        // Predicated region
        $region13: #{_lambda_.1} parent=11 // pred_check
          %p573 = pneg %p175
        $region14: #{_lambda_.1} parent=11 // pred_check_branch
          %575 = sbr.rel (%p573) target = $region16
        $region15: #{_lambda_.1} parent=11 // pred_region
          %s577 = ssub.s32 64, 64
          %578 = vsyncadd [#allocation10], %s577
          %s580 = sshll.u32 [#allocation11], 4
          %s581 = int_to_ptr.vmem [resolvable:$true] %s580
          %583 = dma.hbm_to_vmem [thread:$0]  %s4, 64, %s581, [#allocation10]
        $region16: #{_lambda_.1} parent=11 // pred_fallthru
          _
        // Predicated region
        $region17: #{_lambda_.1} parent=11 // pred_check
          %p584 = pneg %p196
        $region18: #{_lambda_.1} parent=11 // pred_check_branch
          %586 = sbr.rel (%p584) target = $region20
        $region19: #{_lambda_.1} parent=11 // pred_region
          %s588 = ssub.s32 128, 128
          %589 = vsyncadd [#allocation13], %s588
          %s591 = sshll.u32 [#allocation12], 4
          %s592 = int_to_ptr.vmem [resolvable:$true] %s591
          %594 = dma.hbm_to_vmem [thread:$0]  %s5, 128, %s592, [#allocation13]
        $region20: #{_lambda_.1} parent=11 // pred_fallthru
          _
        // Predicated region
        $region21: #{_lambda_.1} parent=11 // pred_check
          %p595 = pneg %p217
        $region22: #{_lambda_.1} parent=11 // pred_check_branch
          %597 = sbr.rel (%p595) target = $region24
        $region23: #{_lambda_.1} parent=11 // pred_region
          %s599 = ssub.s32 32, 32
          %600 = vsyncadd [#allocation13], %s599
          %s602 = sshll.u32 [#allocation14], 4
          %s603 = int_to_ptr.vmem [resolvable:$true] %s602
          %605 = dma.hbm_to_vmem [thread:$0]  %s6, 32, %s603, [#allocation13]
        $region24: #{_lambda_.1} parent=11 // pred_fallthru
          _
        // Predicated region
        $region25: #{_lambda_.1} parent=11 // pred_check
          %p606 = pneg %p238
        $region26: #{_lambda_.1} parent=11 // pred_check_branch
          %608 = sbr.rel (%p606) target = $region28
        $region27: #{_lambda_.1} parent=11 // pred_region
          %s610 = ssub.s32 320, 320
          %611 = vsyncadd [#allocation16], %s610
          %s612 = sshll.u32 [#allocation15], 4
          %s613 = int_to_ptr.vmem [resolvable:$true] %s612
          %618 = dma.hbm_to_vmem [thread:$0]  %s7, 320, %s613, [#allocation16], 64, 64, 4
        $region28: #{_lambda_.1} parent=11 // pred_fallthru
          _
        // Predicated region
        $region29: #{_lambda_.1} parent=11 // pred_check
          %p619 = pneg %p259
        $region30: #{_lambda_.1} parent=11 // pred_check_branch
          %621 = sbr.rel (%p619) target = $region32
        $region31: #{_lambda_.1} parent=11 // pred_region
          %s623 = ssub.s32 32, 32
          %624 = vsyncadd [#allocation16], %s623
          %s626 = sshll.u32 [#allocation17], 4
          %s627 = int_to_ptr.vmem [resolvable:$true] %s626
          %629 = dma.hbm_to_vmem [thread:$0]  %s8, 32, %s627, [#allocation16]
        $region32: #{_lambda_.1} parent=11 // pred_fallthru
          _
        // Predicated region
        $region33: #{_lambda_.1} parent=11 // pred_check
          %p630 = pneg %p280
        $region34: #{_lambda_.1} parent=11 // pred_check_branch
          %632 = sbr.rel (%p630) target = $region36
        $region35: #{_lambda_.1} parent=11 // pred_region
          %s634 = ssub.s32 320, 320
          %635 = vsyncadd [#allocation19], %s634
          %s636 = sshll.u32 [#allocation18], 4
          %s637 = int_to_ptr.vmem [resolvable:$true] %s636
          %642 = dma.hbm_to_vmem [thread:$0]  %s9, 320, %s637, [#allocation19], 64, 64, 4
        $region36: #{_lambda_.1} parent=11 // pred_fallthru
          _
        // Predicated region
        $region37: #{_lambda_.1} parent=11 // pred_check
          %p643 = pneg %p301
        $region38: #{_lambda_.1} parent=11 // pred_check_branch
          %645 = sbr.rel (%p643) target = $region40
        $region39: #{_lambda_.1} parent=11 // pred_region
          %s647 = ssub.s32 64, 64
          %648 = vsyncadd [#allocation19], %s647
          %s650 = sshll.u32 [#allocation20], 4
          %s651 = int_to_ptr.vmem [resolvable:$true] %s650
          %653 = dma.hbm_to_vmem [thread:$0]  %s10, 64, %s651, [#allocation19]
        $region40: #{_lambda_.1} parent=11 // pred_fallthru
          _
        // Predicated region
        $region41: #{_lambda_.1} parent=11 // pred_check
          %p654 = pneg %p322
        $region42: #{_lambda_.1} parent=11 // pred_check_branch
          %656 = sbr.rel (%p654) target = $region44
        $region43: #{_lambda_.1} parent=11 // pred_region
          %s658 = ssub.s32 128, 128
          %659 = vsyncadd [#allocation22], %s658
          %s661 = sshll.u32 [#allocation21], 4
          %s662 = int_to_ptr.vmem [resolvable:$true] %s661
          %664 = dma.hbm_to_vmem [thread:$0]  %s11, 128, %s662, [#allocation22]
        $region44: #{_lambda_.1} parent=11 // pred_fallthru
          _
        // Predicated region
        $region45: #{_lambda_.1} parent=11 // pred_check
          %p665 = pneg %p343
        $region46: #{_lambda_.1} parent=11 // pred_check_branch
          %667 = sbr.rel (%p665) target = $region48
        $region47: #{_lambda_.1} parent=11 // pred_region
          %s669 = ssub.s32 64, 64
          %670 = vsyncadd [#allocation22], %s669
          %s672 = sshll.u32 [#allocation23], 4
          %s673 = int_to_ptr.vmem [resolvable:$true] %s672
          %675 = dma.hbm_to_vmem [thread:$0]  %s12, 64, %s673, [#allocation22]
        $region48: #{_lambda_.1} parent=11 // pred_fallthru
          _
        // Predicated region
        $region49: #{_lambda_.1} parent=11 // pred_check
          %p676 = pneg %p364
        $region50: #{_lambda_.1} parent=11 // pred_check_branch
          %678 = sbr.rel (%p676) target = $region52
        $region51: #{_lambda_.1} parent=11 // pred_region
          %s680 = ssub.s32 320, 320
          %681 = vsyncadd [#allocation25], %s680
          %s682 = sshll.u32 [#allocation24], 4
          %s683 = int_to_ptr.vmem [resolvable:$true] %s682
          %688 = dma.hbm_to_vmem [thread:$0]  %s13, 320, %s683, [#allocation25], 64, 64, 4
        $region52: #{_lambda_.1} parent=11 // pred_fallthru
          _
        // Predicated region
        $region53: #{_lambda_.1} parent=11 // pred_check
          %p689 = pneg %p385
        $region54: #{_lambda_.1} parent=11 // pred_check_branch
          %691 = sbr.rel (%p689) target = $region56
        $region55: #{_lambda_.1} parent=11 // pred_region
          %s693 = ssub.s32 64, 64
          %694 = vsyncadd [#allocation25], %s693
          %s696 = sshll.u32 [#allocation26], 4
          %s697 = int_to_ptr.vmem [resolvable:$true] %s696
          %699 = dma.hbm_to_vmem [thread:$0]  %s14, 64, %s697, [#allocation25]
        $region56: #{_lambda_.1} parent=11 // pred_fallthru
          _
        // Predicated region
        $region57: #{_lambda_.1} parent=11 // pred_check
          %p700 = pneg %p406
        $region58: #{_lambda_.1} parent=11 // pred_check_branch
          %702 = sbr.rel (%p700) target = $region60
        $region59: #{_lambda_.1} parent=11 // pred_region
          %s704 = ssub.s32 128, 128
          %705 = vsyncadd [#allocation28], %s704
          %s707 = sshll.u32 [#allocation27], 4
          %s708 = int_to_ptr.vmem [resolvable:$true] %s707
          %710 = dma.hbm_to_vmem [thread:$0]  %s15, 128, %s708, [#allocation28]
        $region60: #{_lambda_.1} parent=11 // pred_fallthru
          _
        // Predicated region
        $region61: #{_lambda_.1} parent=11 // pred_check
          %p711 = pneg %p427
        $region62: #{_lambda_.1} parent=11 // pred_check_branch
          %713 = sbr.rel (%p711) target = $region64
        $region63: #{_lambda_.1} parent=11 // pred_region
          %s715 = ssub.s32 32, 32
          %716 = vsyncadd [#allocation28], %s715
          %s718 = sshll.u32 [#allocation29], 4
          %s719 = int_to_ptr.vmem [resolvable:$true] %s718
          %721 = dma.hbm_to_vmem [thread:$0]  %s16, 32, %s719, [#allocation28]
        $region64: #{_lambda_.1} parent=11 // pred_fallthru
          _
        // Predicated region
        $region65: #{_lambda_.1} parent=11 // pred_check
          %p722 = pneg %p448
        $region66: #{_lambda_.1} parent=11 // pred_check_branch
          %724 = sbr.rel (%p722) target = $region68
        $region67: #{_lambda_.1} parent=11 // pred_region
          %s726 = ssub.s32 320, 320
          %727 = vsyncadd [#allocation31], %s726
          %s728 = sshll.u32 [#allocation30], 4
          %s729 = int_to_ptr.vmem [resolvable:$true] %s728
          %734 = dma.hbm_to_vmem [thread:$0]  %s17, 320, %s729, [#allocation31], 64, 64, 4
        $region68: #{_lambda_.1} parent=11 // pred_fallthru
          _
        // Predicated region
        $region69: #{_lambda_.1} parent=11 // pred_check
          %p735 = pneg %p469
        $region70: #{_lambda_.1} parent=11 // pred_check_branch
          %737 = sbr.rel (%p735) target = $region72
        $region71: #{_lambda_.1} parent=11 // pred_region
          %s739 = ssub.s32 32, 32
          %740 = vsyncadd [#allocation31], %s739
          %s742 = sshll.u32 [#allocation32], 4
          %s743 = int_to_ptr.vmem [resolvable:$true] %s742
          %745 = dma.hbm_to_vmem [thread:$0]  %s18, 32, %s743, [#allocation31]
        $region72: #{_lambda_.1} parent=11 // pred_fallthru
          _
        // Predicated region
        $region73: #{_lambda_.1} parent=11 // pred_check
          %p746 = pneg %p490
        $region74: #{_lambda_.1} parent=11 // pred_check_branch
          %748 = sbr.rel (%p746) target = $region76
        $region75: #{_lambda_.1} parent=11 // pred_region
          %s750 = ssub.s32 16, 16
          %751 = vsyncadd [#allocation34], %s750
          %s753 = sshll.u32 [#allocation33], 4
          %s754 = int_to_ptr.vmem [resolvable:$true] %s753
          %756 = dma.hbm_to_vmem [thread:$0]  %s19, 16, %s754, [#allocation34]
        $region76: #{_lambda_.1} parent=11 // pred_fallthru
          _
        // Predicated region
        $region77: #{_lambda_.1} parent=11 // pred_check
          %p757 = pneg %p511
        $region78: #{_lambda_.1} parent=11 // pred_check_branch
          %759 = sbr.rel (%p757) target = $region80
        $region79: #{_lambda_.1} parent=11 // pred_region
          %s761 = ssub.s32 256, 256
          %762 = vsyncadd [#allocation34], %s761
          %s763 = sshll.u32 [#allocation35], 4
          %s764 = int_to_ptr.vmem [resolvable:$true] %s763
          %769 = dma.hbm_to_vmem [thread:$0]  %s20, 256, %s764, [#allocation34], 64, 64, 4
        $region80: #{_lambda_.1} parent=11 // pred_fallthru
          _
        // Predicated region
        $region81: #{_lambda_.1} parent=11 // pred_check
          %p770 = pneg %p532
        $region82: #{_lambda_.1} parent=11 // pred_check_branch
          %772 = sbr.rel (%p770) target = $region84
        $region83: #{_lambda_.1} parent=11 // pred_region
          _
        $region84: #{_lambda_.1} parent=11 // pred_fallthru
          _
      $region12: #{_lambda_.1} parent=5 // pred_fallthru
        _
      %p773 = scmp.lt.s32.totalorder %s50, 2
      // Predicated region
      $region85: #{_lambda_.1} parent=5 // pred_check
        %p774 = pneg %p773
      $region86: #{_lambda_.1} parent=5 // pred_check_branch
        %776 = sbr.rel (%p774) target = $region88
      $region87: #{_lambda_.1} parent=5 // pred_region
        // Predicated region
        $region89: #{_lambda_.1} parent=87 // pred_check
          %p777 = pneg %p70
        $region90: #{_lambda_.1} parent=87 // pred_check_branch
          %779 = sbr.rel (%p777) target = $region92
        $region91: #{_lambda_.1} parent=87 // pred_region
          %s780 = sand.u32 %s60, 1
          %s781 = scalar_lea.sflag [#allocation4], %s780
          %s782 = sand.u32 %s60, 1
          %s783 = smul.addr %s782, 16
          %s784 = scalar_lea.vmem [#allocation3], %s783
          %s786 = ssub.s32 256, 256
          %787 = vsyncadd %s781, %s786
          %s788 = smul.addr %s50, 2
          %s789 = smul.addr %s788, 128
          %s790 = scalar_lea.hbm %s0, %s789
          %s791 = sshll.u32 %s784, 4
          %s792 = int_to_ptr.vmem [resolvable:$true] %s791
          %797 = dma.hbm_to_vmem [thread:$0]  %s790, 256, %s792, %s781, 128, 128, 8
        $region92: #{_lambda_.1} parent=87 // pred_fallthru
          _
        // Predicated region
        $region93: #{_lambda_.1} parent=87 // pred_check
          %p798 = pneg %p96
        $region94: #{_lambda_.1} parent=87 // pred_check_branch
          %800 = sbr.rel (%p798) target = $region96
        $region95: #{_lambda_.1} parent=87 // pred_region
          %s801 = sand.u32 %s50, 1
          %s802 = scalar_lea.sflag [#allocation7], %s801
          %s803 = sand.u32 %s86, 1
          %s804 = smul.addr %s803, 8
          %s805 = scalar_lea.vmem [#allocation6], %s804
          %s807 = ssub.s32 128, 128
          %808 = vsyncadd %s802, %s807
          %s809 = smul.addr %s50, 128
          %s810 = scalar_lea.hbm %s1, %s809
          %s812 = sshll.u32 %s805, 4
          %s813 = int_to_ptr.vmem [resolvable:$true] %s812
          %815 = dma.hbm_to_vmem [thread:$0]  %s810, 128, %s813, %s802
        $region96: #{_lambda_.1} parent=87 // pred_fallthru
          _
        // Predicated region
        $region97: #{_lambda_.1} parent=87 // pred_check
          %p816 = pneg %p122
        $region98: #{_lambda_.1} parent=87 // pred_check_branch
          %818 = sbr.rel (%p816) target = $region100
        $region99: #{_lambda_.1} parent=87 // pred_region
          %s819 = sand.u32 %s50, 1
          %s820 = scalar_lea.sflag [#allocation7], %s819
          %s821 = sand.u32 %s112, 1
          %s822 = smul.addr %s821, 4
          %s823 = scalar_lea.vmem [#allocation8], %s822
          %s825 = ssub.s32 64, 64
          %826 = vsyncadd %s820, %s825
          %s827 = smul.addr %s50, 64
          %s828 = scalar_lea.hbm %s2, %s827
          %s830 = sshll.u32 %s823, 4
          %s831 = int_to_ptr.vmem [resolvable:$true] %s830
          %833 = dma.hbm_to_vmem [thread:$0]  %s828, 64, %s831, %s820
        $region100: #{_lambda_.1} parent=87 // pred_fallthru
          _
        // Predicated region
        $region101: #{_lambda_.1} parent=87 // pred_check
          %p834 = pneg %p148
        $region102: #{_lambda_.1} parent=87 // pred_check_branch
          %836 = sbr.rel (%p834) target = $region104
        $region103: #{_lambda_.1} parent=87 // pred_region
          %s837 = sand.u32 %s50, 1
          %s838 = scalar_lea.sflag [#allocation10], %s837
          %s839 = sand.u32 %s138, 1
          %s840 = smul.addr %s839, 4
          %s841 = scalar_lea.vmem [#allocation9], %s840
          %s843 = ssub.s32 64, 64
          %844 = vsyncadd %s838, %s843
          %s845 = smul.addr %s50, 64
          %s846 = scalar_lea.hbm %s3, %s845
          %s848 = sshll.u32 %s841, 4
          %s849 = int_to_ptr.vmem [resolvable:$true] %s848
          %851 = dma.hbm_to_vmem [thread:$0]  %s846, 64, %s849, %s838
        $region104: #{_lambda_.1} parent=87 // pred_fallthru
          _
      $region88: #{_lambda_.1} parent=5 // pred_fallthru
        _
      %p852 = scmp.le.s32.totalorder 1, %s50
      %p853 = scmp.lt.s32.totalorder %s50, 3
      %p854 = pnand %p852, %p853
      %p855 = pneg %p854
      // Predicated region
      $region105: #{_lambda_.1} parent=5 // pred_check
        _
      $region106: #{_lambda_.1} parent=5 // pred_check_branch
        %857 = sbr.rel (%p854) target = $region108
      $region107: #{_lambda_.1} parent=5 // pred_region
        %s858 = ssub.s32 %s50, 1
        %s859 = sand.u32 %s63, 1
        %s860 = scalar_lea.sflag [#allocation4], %s859
        %s861 = sand.u32 %s63, 1
        %s862 = smul.addr %s861, 16
        %s863 = scalar_lea.vmem [#allocation3], %s862
        // Predicated region
        $region109: #{_lambda_.1} parent=107 // pred_check
          %p864 = pneg %p76
        $region110: #{_lambda_.1} parent=107 // pred_check_branch
          %866 = sbr.rel (%p864) target = $region112
        $region111: #{_lambda_.1} parent=107 // pred_region
          %867 = dma.done %s860, 256
        $region112: #{_lambda_.1} parent=107 // pred_fallthru
          _
        %s868 = sand.u32 %s55, 1
        %s869 = scalar_lea.sflag [#allocation7], %s868
        %s870 = sand.u32 %s89, 1
        %s871 = smul.addr %s870, 8
        %s872 = scalar_lea.vmem [#allocation6], %s871
        // Predicated region
        $region113: #{_lambda_.1} parent=107 // pred_check
          %p873 = pneg %p102
        $region114: #{_lambda_.1} parent=107 // pred_check_branch
          %875 = sbr.rel (%p873) target = $region116
        $region115: #{_lambda_.1} parent=107 // pred_region
          %876 = dma.done %s869, 128
        $region116: #{_lambda_.1} parent=107 // pred_fallthru
          _
        %s877 = sand.u32 %s55, 1
        %s878 = scalar_lea.sflag [#allocation7], %s877
        %s879 = sand.u32 %s115, 1
        %s880 = smul.addr %s879, 4
        %s881 = scalar_lea.vmem [#allocation8], %s880
        // Predicated region
        $region117: #{_lambda_.1} parent=107 // pred_check
          %p882 = pneg %p128
        $region118: #{_lambda_.1} parent=107 // pred_check_branch
          %884 = sbr.rel (%p882) target = $region120
        $region119: #{_lambda_.1} parent=107 // pred_region
          %885 = dma.done %s878, 64
        $region120: #{_lambda_.1} parent=107 // pred_fallthru
          _
        %s886 = sand.u32 %s55, 1
        %s887 = scalar_lea.sflag [#allocation10], %s886
        %s888 = sand.u32 %s141, 1
        %s889 = smul.addr %s888, 4
        %s890 = scalar_lea.vmem [#allocation9], %s889
        // Predicated region
        $region121: #{_lambda_.1} parent=107 // pred_check
          %p891 = pneg %p154
        $region122: #{_lambda_.1} parent=107 // pred_check_branch
          %893 = sbr.rel (%p891) target = $region124
        $region123: #{_lambda_.1} parent=107 // pred_region
          %894 = dma.done %s887, 64
        $region124: #{_lambda_.1} parent=107 // pred_fallthru
          _
        // Predicated region
        $region125: #{_lambda_.1} parent=107 // pred_check
          %p895 = pneg %p175
        $region126: #{_lambda_.1} parent=107 // pred_check_branch
          %897 = sbr.rel (%p895) target = $region128
        $region127: #{_lambda_.1} parent=107 // pred_region
          %898 = dma.done [#allocation10], 64
        $region128: #{_lambda_.1} parent=107 // pred_fallthru
          _
        // Predicated region
        $region129: #{_lambda_.1} parent=107 // pred_check
          %p899 = pneg %p196
        $region130: #{_lambda_.1} parent=107 // pred_check_branch
          %901 = sbr.rel (%p899) target = $region132
        $region131: #{_lambda_.1} parent=107 // pred_region
          %902 = dma.done [#allocation13], 128
        $region132: #{_lambda_.1} parent=107 // pred_fallthru
          _
        // Predicated region
        $region133: #{_lambda_.1} parent=107 // pred_check
          %p903 = pneg %p217
        $region134: #{_lambda_.1} parent=107 // pred_check_branch
          %905 = sbr.rel (%p903) target = $region136
        $region135: #{_lambda_.1} parent=107 // pred_region
          %906 = dma.done [#allocation13], 32
        $region136: #{_lambda_.1} parent=107 // pred_fallthru
          _
        // Predicated region
        $region137: #{_lambda_.1} parent=107 // pred_check
          %p907 = pneg %p238
        $region138: #{_lambda_.1} parent=107 // pred_check_branch
          %909 = sbr.rel (%p907) target = $region140
        $region139: #{_lambda_.1} parent=107 // pred_region
          %910 = dma.done [#allocation16], 320
        $region140: #{_lambda_.1} parent=107 // pred_fallthru
          _
        // Predicated region
        $region141: #{_lambda_.1} parent=107 // pred_check
          %p911 = pneg %p259
        $region142: #{_lambda_.1} parent=107 // pred_check_branch
          %913 = sbr.rel (%p911) target = $region144
        $region143: #{_lambda_.1} parent=107 // pred_region
          %914 = dma.done [#allocation16], 32
        $region144: #{_lambda_.1} parent=107 // pred_fallthru
          _
        // Predicated region
        $region145: #{_lambda_.1} parent=107 // pred_check
          %p915 = pneg %p280
        $region146: #{_lambda_.1} parent=107 // pred_check_branch
          %917 = sbr.rel (%p915) target = $region148
        $region147: #{_lambda_.1} parent=107 // pred_region
          %918 = dma.done [#allocation19], 320
        $region148: #{_lambda_.1} parent=107 // pred_fallthru
          _
        // Predicated region
        $region149: #{_lambda_.1} parent=107 // pred_check
          %p919 = pneg %p301
        $region150: #{_lambda_.1} parent=107 // pred_check_branch
          %921 = sbr.rel (%p919) target = $region152
        $region151: #{_lambda_.1} parent=107 // pred_region
          %922 = dma.done [#allocation19], 64
        $region152: #{_lambda_.1} parent=107 // pred_fallthru
          _
        // Predicated region
        $region153: #{_lambda_.1} parent=107 // pred_check
          %p923 = pneg %p322
        $region154: #{_lambda_.1} parent=107 // pred_check_branch
          %925 = sbr.rel (%p923) target = $region156
        $region155: #{_lambda_.1} parent=107 // pred_region
          %926 = dma.done [#allocation22], 128
        $region156: #{_lambda_.1} parent=107 // pred_fallthru
          _
        // Predicated region
        $region157: #{_lambda_.1} parent=107 // pred_check
          %p927 = pneg %p343
        $region158: #{_lambda_.1} parent=107 // pred_check_branch
          %929 = sbr.rel (%p927) target = $region160
        $region159: #{_lambda_.1} parent=107 // pred_region
          %930 = dma.done [#allocation22], 64
        $region160: #{_lambda_.1} parent=107 // pred_fallthru
          _
        // Predicated region
        $region161: #{_lambda_.1} parent=107 // pred_check
          %p931 = pneg %p364
        $region162: #{_lambda_.1} parent=107 // pred_check_branch
          %933 = sbr.rel (%p931) target = $region164
        $region163: #{_lambda_.1} parent=107 // pred_region
          %934 = dma.done [#allocation25], 320
        $region164: #{_lambda_.1} parent=107 // pred_fallthru
          _
        // Predicated region
        $region165: #{_lambda_.1} parent=107 // pred_check
          %p935 = pneg %p385
        $region166: #{_lambda_.1} parent=107 // pred_check_branch
          %937 = sbr.rel (%p935) target = $region168
        $region167: #{_lambda_.1} parent=107 // pred_region
          %938 = dma.done [#allocation25], 64
        $region168: #{_lambda_.1} parent=107 // pred_fallthru
          _
        // Predicated region
        $region169: #{_lambda_.1} parent=107 // pred_check
          %p939 = pneg %p406
        $region170: #{_lambda_.1} parent=107 // pred_check_branch
          %941 = sbr.rel (%p939) target = $region172
        $region171: #{_lambda_.1} parent=107 // pred_region
          %942 = dma.done [#allocation28], 128
        $region172: #{_lambda_.1} parent=107 // pred_fallthru
          _
        // Predicated region
        $region173: #{_lambda_.1} parent=107 // pred_check
          %p943 = pneg %p427
        $region174: #{_lambda_.1} parent=107 // pred_check_branch
          %945 = sbr.rel (%p943) target = $region176
        $region175: #{_lambda_.1} parent=107 // pred_region
          %946 = dma.done [#allocation28], 32
        $region176: #{_lambda_.1} parent=107 // pred_fallthru
          _
        // Predicated region
        $region177: #{_lambda_.1} parent=107 // pred_check
          %p947 = pneg %p448
        $region178: #{_lambda_.1} parent=107 // pred_check_branch
          %949 = sbr.rel (%p947) target = $region180
        $region179: #{_lambda_.1} parent=107 // pred_region
          %950 = dma.done [#allocation31], 320
        $region180: #{_lambda_.1} parent=107 // pred_fallthru
          _
        // Predicated region
        $region181: #{_lambda_.1} parent=107 // pred_check
          %p951 = pneg %p469
        $region182: #{_lambda_.1} parent=107 // pred_check_branch
          %953 = sbr.rel (%p951) target = $region184
        $region183: #{_lambda_.1} parent=107 // pred_region
          %954 = dma.done [#allocation31], 32
        $region184: #{_lambda_.1} parent=107 // pred_fallthru
          _
        // Predicated region
        $region185: #{_lambda_.1} parent=107 // pred_check
          %p955 = pneg %p490
        $region186: #{_lambda_.1} parent=107 // pred_check_branch
          %957 = sbr.rel (%p955) target = $region188
        $region187: #{_lambda_.1} parent=107 // pred_region
          %958 = dma.done [#allocation34], 16
        $region188: #{_lambda_.1} parent=107 // pred_fallthru
          _
        // Predicated region
        $region189: #{_lambda_.1} parent=107 // pred_check
          %p959 = pneg %p511
        $region190: #{_lambda_.1} parent=107 // pred_check_branch
          %961 = sbr.rel (%p959) target = $region192
        $region191: #{_lambda_.1} parent=107 // pred_region
          %962 = dma.done [#allocation34], 256
        $region192: #{_lambda_.1} parent=107 // pred_fallthru
          _
        %s963 = sand.u32 %s63, 1
        %s964 = scalar_lea.sflag [#allocation4], %s963
        %s965 = sand.u32 %s63, 1
        %s966 = smul.addr %s965, 16
        %s967 = scalar_lea.vmem [#allocation3], %s966
        %p968 = pneg %p76
        %p969 = pneg %p73
        %s970 = sand.u32 %s55, 1
        %s971 = scalar_lea.sflag [#allocation7], %s970
        %s972 = sand.u32 %s89, 1
        %s973 = smul.addr %s972, 8
        %s974 = scalar_lea.vmem [#allocation6], %s973
        %p975 = pneg %p102
        %p976 = pneg %p99
        %s977 = sand.u32 %s55, 1
        %s978 = scalar_lea.sflag [#allocation7], %s977
        %s979 = sand.u32 %s115, 1
        %s980 = smul.addr %s979, 4
        %s981 = scalar_lea.vmem [#allocation8], %s980
        %p982 = pneg %p128
        %p983 = pneg %p125
        %s984 = sand.u32 %s55, 1
        %s985 = scalar_lea.sflag [#allocation10], %s984
        %s986 = sand.u32 %s141, 1
        %s987 = smul.addr %s986, 4
        %s988 = scalar_lea.vmem [#allocation9], %s987
        %p989 = pneg %p154
        %p990 = pneg %p151
        %p991 = pneg %p175
        %p992 = pneg %p172
        %p993 = pneg %p196
        %p994 = pneg %p193
        %p995 = pneg %p217
        %p996 = pneg %p214
        %p997 = pneg %p238
        %p998 = pneg %p235
        %p999 = pneg %p259
        %p1000 = pneg %p256
        %p1001 = pneg %p280
        %p1002 = pneg %p277
        %p1003 = pneg %p301
        %p1004 = pneg %p298
        %p1005 = pneg %p322
        %p1006 = pneg %p319
        %p1007 = pneg %p343
        %p1008 = pneg %p340
        %p1009 = pneg %p364
        %p1010 = pneg %p361
        %p1011 = pneg %p385
        %p1012 = pneg %p382
        %p1013 = pneg %p406
        %p1014 = pneg %p403
        %p1015 = pneg %p427
        %p1016 = pneg %p424
        %p1017 = pneg %p448
        %p1018 = pneg %p445
        %p1019 = pneg %p469
        %p1020 = pneg %p466
        %p1021 = pneg %p490
        %p1022 = pneg %p487
        %p1023 = pneg %p511
        %p1024 = pneg %p508
        %p1025 = pneg %p532
        %p1026 = pneg %p529
        %p1027 = pneg %p558
        %p1028 = pneg %p555
        %s1029 = sand.u32 %s545, 1
        %s1030 = scalar_lea.sflag [#allocation5], %s1029
        %s1031 = sand.u32 %s545, 1
        %s1032 = smul.addr %s1031, 8
        %s1033 = scalar_lea.vmem [#allocation36], %s1032
        %v1035 = vld [vmem:[%s881] sm:$0xf]
        %v1036 = vld [vmem:[%s890] sm:$0xf]
        %v1037 = vld [vmem:[%s863] sm:$0xff]
        %v1038 = vld [vmem:[%s863 + $0x8] sm:$0xff]
        %v1039 = vpack.c.bf16 %v1038, %v1037
        %v1040 = vld [vmem:[#allocation11] sm:$0xf]
        %v1041 = vld [vmem:[#allocation12] sm:$0xff]
        %1043 = vset.pattern.permute.xlu0 0
        %1044 = vperm.xlu0 %1043, %v1041
        %v1045 = vpop.permute.xlu0 %1044
        %vm1047 = vcmask 130048
        %v1049 = vsel %vm1047, %v1040, 0
        %1051 = vmatprep.subr.bf16.mxu0 0
        %1052 = vmatpush1.bf16.msra.mxu0 %v1039
        %1053 = vmatprep.subr.bf16.mxu0 0
        %1054 = vmatpush1.bf16.msra.mxu0 0
        %1055 = vmatprep.subr.bf16.mxu0 0
        %1056 = vmatpush1.bf16.msra.mxu0 0
        %1057 = vmatprep.subr.bf16.mxu0 0
        %1058 = vmatpush1.bf16.msra.mxu0 0
        %1059 = vmatprep.subr.bf16.mxu0 0
        %1060 = vmatpush1.bf16.msra.mxu0 0
        %1061 = vmatprep.subr.bf16.mxu0 0
        %1062 = vmatpush1.bf16.msra.mxu0 0
        %1063 = vmatprep.subr.bf16.mxu0 0
        %1064 = vmatpush1.bf16.msra.mxu0 0
        %1065 = vmatprep.subr.bf16.mxu0 0
        %1066 = vmatpush1.bf16.msra.mxu0 0
        %1067 = vmatprep.subr.bf16.mxu0 0
        %1068 = vmatpush1.bf16.msra.mxu0 0
        %1069 = vmatprep.subr.bf16.mxu0 0
        %1070 = vmatpush1.bf16.msra.mxu0 0
        %1071 = vmatprep.subr.bf16.mxu0 0
        %1072 = vmatpush1.bf16.msra.mxu0 0
        %1073 = vmatprep.subr.bf16.mxu0 0
        %1074 = vmatpush1.bf16.msra.mxu0 0
        %1075 = vmatprep.subr.bf16.mxu0 0
        %1076 = vmatpush1.bf16.msra.mxu0 0
        %1077 = vmatprep.subr.bf16.mxu0 0
        %1078 = vmatpush1.bf16.msra.mxu0 0
        %1079 = vmatprep.subr.bf16.mxu0 0
        %1080 = vmatpush1.bf16.msra.mxu0 0
        %1081 = vmatprep.subr.bf16.mxu0 0
        %1082 = vmatpush1.bf16.msra.mxu0 0
        %1083 = vmatprep.mubr.bf16.mxu0 0
        %1084 = vmatmul.mubr.bf16.gmra.mrb[0].mxu0 %v1049
        %v1085 = vpop.f32.mrb[0].mxu0
        %v1086 = vadd.f32 %v1045, %v1085
        %v1087 = vpop.f32.mrb[0].mxu0
        %v1088 = vpop.f32.mrb[0].mxu0
        %v1089 = vpop.f32.mrb[0].mxu0
        %1090 = vdwg.mxu0
        %v1091 = vpack.c.bf16 %v1086, %v1086
        %v1092 = vld [vmem:[#allocation14] sm:$0x3]
        %v1093 = vlaneseq
        %v1094 = vshrl.u32 %v1093, 7
        %v1095 = vsub.s32 0, %v1094
        %v1096 = vrot.slane %v1035, %v1095
        %vm1097 = vcmask 31744
        %v1099 = vsel %vm1097, %v1091, 0
        %vm1101 = vcmask 1041408
        %v1103 = vsel %vm1101, %v1092, 0
        %1105 = vmatprep.subr.bf16.mxu0 0
        %1106 = vmatpush1.bf16.msra.mxu0 %v1103
        %1107 = vmatprep.subr.bf16.mxu0 0
        %1108 = vmatpush1.bf16.msra.mxu0 0
        %1109 = vmatprep.subr.bf16.mxu0 0
        %1110 = vmatpush1.bf16.msra.mxu0 0
        %1111 = vmatprep.subr.bf16.mxu0 0
        %1112 = vmatpush1.bf16.msra.mxu0 0
        %1113 = vmatprep.subr.bf16.mxu0 0
        %1114 = vmatpush1.bf16.msra.mxu0 0
        %1115 = vmatprep.subr.bf16.mxu0 0
        %1116 = vmatpush1.bf16.msra.mxu0 0
        %1117 = vmatprep.subr.bf16.mxu0 0
        %1118 = vmatpush1.bf16.msra.mxu0 0
        %1119 = vmatprep.subr.bf16.mxu0 0
        %1120 = vmatpush1.bf16.msra.mxu0 0
        %1121 = vmatprep.subr.bf16.mxu0 0
        %1122 = vmatpush1.bf16.msra.mxu0 0
        %1123 = vmatprep.subr.bf16.mxu0 0
        %1124 = vmatpush1.bf16.msra.mxu0 0
        %1125 = vmatprep.subr.bf16.mxu0 0
        %1126 = vmatpush1.bf16.msra.mxu0 0
        %1127 = vmatprep.subr.bf16.mxu0 0
        %1128 = vmatpush1.bf16.msra.mxu0 0
        %1129 = vmatprep.subr.bf16.mxu0 0
        %1130 = vmatpush1.bf16.msra.mxu0 0
        %1131 = vmatprep.subr.bf16.mxu0 0
        %1132 = vmatpush1.bf16.msra.mxu0 0
        %1133 = vmatprep.subr.bf16.mxu0 0
        %1134 = vmatpush1.bf16.msra.mxu0 0
        %1135 = vmatprep.subr.bf16.mxu0 0
        %1136 = vmatpush1.bf16.msra.mxu0 0
        %1137 = vmatprep.mubr.bf16.mxu0 0
        %1138 = vmatmul.mubr.bf16.gmra.mrb[0].mxu0 %v1099
        %v1139 = vpop.f32.mrb[0].mxu0
        %v1140 = vadd.f32 %v1096, %v1139
        %v1141 = vpop.f32.mrb[0].mxu0
        %v1142 = vpop.f32.mrb[0].mxu0
        %v1143 = vpop.f32.mrb[0].mxu0
        %1144 = vdwg.mxu0
        %v1145 = vmax.f32 %v1140, 0.0
        %v1146 = vpack.c.bf16 %v1145, %v1145
        %1148 = vrot.lane.b32.xlu0 %v1091, 32
        %v1149 = vpop.permute.xlu0 %1148
        %vm1150 = vcmask 261120
        %v1153 = vsel %vm1150, %v1146, %v1149
        %v1154 = vld [vmem:[#allocation15] sm:$0xf]
        %v1155 = vld [vmem:[#allocation15 + $0x4] sm:$0xf]
        %v1156 = vld [vmem:[#allocation15 + $0x8] sm:$0xf]
        %v1157 = vld [vmem:[#allocation15 + $0xc] sm:$0xf]
        %v1158 = vld [vmem:[#allocation15 + $0x10] sm:$0x3]
        %v1159 = vlaneseq
        %v1160 = vshrl.u32 %v1159, 7
        %v1161 = vsub.s32 0, %v1160
        %v1162 = vrot.slane %v1036, %v1161
        %v1168 = vunpack.c.l.b16 %v1154
        %v1169 = vunpack.c.l.b16 %v1155
        %v1170 = vunpack.c.l.b16 %v1156
        %v1171 = vunpack.c.l.b16 %v1157
        %v1172 = vunpack.c.l.b16 %v1158
        %v1173 = vpack.c.b16 %v1169, %v1168
        %v1174 = vpack.c.b16 %v1171, %v1170
        %v1175 = vpack.c.b16 %v1172, %v1172
        %vm1178 = vcmask 293888
        %v1179 = vsel %vm1178, %v1153, 0
        %v1182 = vsel %vm1101, %v1175, 0
        %1184 = vmatprep.subr.bf16.mxu0 0
        %1185 = vmatpush1.bf16.msra.mxu0 %v1173
        %1186 = vmatprep.subr.bf16.mxu0 0
        %1187 = vmatpush1.bf16.msra.mxu0 %v1174
        %1188 = vmatprep.subr.bf16.mxu0 0
        %1189 = vmatpush1.bf16.msra.mxu0 %v1182
        %1190 = vmatprep.subr.bf16.mxu0 0
        %1191 = vmatpush1.bf16.msra.mxu0 0
        %1192 = vmatprep.subr.bf16.mxu0 0
        %1193 = vmatpush1.bf16.msra.mxu0 0
        %1194 = vmatprep.subr.bf16.mxu0 0
        %1195 = vmatpush1.bf16.msra.mxu0 0
        %1196 = vmatprep.subr.bf16.mxu0 0
        %1197 = vmatpush1.bf16.msra.mxu0 0
        %1198 = vmatprep.subr.bf16.mxu0 0
        %1199 = vmatpush1.bf16.msra.mxu0 0
        %1200 = vmatprep.subr.bf16.mxu0 0
        %1201 = vmatpush1.bf16.msra.mxu0 0
        %1202 = vmatprep.subr.bf16.mxu0 0
        %1203 = vmatpush1.bf16.msra.mxu0 0
        %1204 = vmatprep.subr.bf16.mxu0 0
        %1205 = vmatpush1.bf16.msra.mxu0 0
        %1206 = vmatprep.subr.bf16.mxu0 0
        %1207 = vmatpush1.bf16.msra.mxu0 0
        %1208 = vmatprep.subr.bf16.mxu0 0
        %1209 = vmatpush1.bf16.msra.mxu0 0
        %1210 = vmatprep.subr.bf16.mxu0 0
        %1211 = vmatpush1.bf16.msra.mxu0 0
        %1212 = vmatprep.subr.bf16.mxu0 0
        %1213 = vmatpush1.bf16.msra.mxu0 0
        %1214 = vmatprep.subr.bf16.mxu0 0
        %1215 = vmatpush1.bf16.msra.mxu0 0
        %1216 = vmatprep.mubr.bf16.mxu0 0
        %1217 = vmatmul.mubr.bf16.gmra.mrb[0].mxu0 %v1179
        %v1218 = vpop.f32.mrb[0].mxu0
        %v1219 = vadd.f32 %v1162, %v1218
        %v1220 = vpop.f32.mrb[0].mxu0
        %v1221 = vpop.f32.mrb[0].mxu0
        %v1222 = vpop.f32.mrb[0].mxu0
        %1223 = vdwg.mxu0
        %v1224 = vld [vmem:[%s872] sm:$0xff]
        %v1225 = vpack.c.bf16 %v1224, %v1224
        %v1226 = vld [vmem:[#allocation17] sm:$0x3]
        %v1227 = vlaneseq
        %v1228 = vshrl.u32 %v1227, 7
        %v1229 = vsub.s32 1, %v1228
        %v1230 = vrot.slane %v1035, %v1229
        %vm1231 = vcmask 23552
        %v1233 = vsel %vm1231, %v1225, 0
        %vm1235 = vcmask 1040384
        %v1236 = vsel %vm1235, 4294967295, 65535
        %v1237 = vsel %vm1101, %v1236, 0
        %v1239 = vand.u32 %v1226, %v1237
        %1241 = vmatprep.subr.bf16.mxu0 0
        %1242 = vmatpush1.bf16.msra.mxu0 %v1239
        %1243 = vmatprep.subr.bf16.mxu0 0
        %1244 = vmatpush1.bf16.msra.mxu0 0
        %1245 = vmatprep.subr.bf16.mxu0 0
        %1246 = vmatpush1.bf16.msra.mxu0 0
        %1247 = vmatprep.subr.bf16.mxu0 0
        %1248 = vmatpush1.bf16.msra.mxu0 0
        %1249 = vmatprep.subr.bf16.mxu0 0
        %1250 = vmatpush1.bf16.msra.mxu0 0
        %1251 = vmatprep.subr.bf16.mxu0 0
        %1252 = vmatpush1.bf16.msra.mxu0 0
        %1253 = vmatprep.subr.bf16.mxu0 0
        %1254 = vmatpush1.bf16.msra.mxu0 0
        %1255 = vmatprep.subr.bf16.mxu0 0
        %1256 = vmatpush1.bf16.msra.mxu0 0
        %1257 = vmatprep.subr.bf16.mxu0 0
        %1258 = vmatpush1.bf16.msra.mxu0 0
        %1259 = vmatprep.subr.bf16.mxu0 0
        %1260 = vmatpush1.bf16.msra.mxu0 0
        %1261 = vmatprep.subr.bf16.mxu0 0
        %1262 = vmatpush1.bf16.msra.mxu0 0
        %1263 = vmatprep.subr.bf16.mxu0 0
        %1264 = vmatpush1.bf16.msra.mxu0 0
        %1265 = vmatprep.subr.bf16.mxu0 0
        %1266 = vmatpush1.bf16.msra.mxu0 0
        %1267 = vmatprep.subr.bf16.mxu0 0
        %1268 = vmatpush1.bf16.msra.mxu0 0
        %1269 = vmatprep.subr.bf16.mxu0 0
        %1270 = vmatpush1.bf16.msra.mxu0 0
        %1271 = vmatprep.subr.bf16.mxu0 0
        %1272 = vmatpush1.bf16.msra.mxu0 0
        %1273 = vmatprep.mubr.bf16.mxu0 0
        %1274 = vmatmul.mubr.bf16.gmra.mrb[0].mxu0 %v1233
        %v1275 = vpop.f32.mrb[0].mxu0
        %v1276 = vadd.f32 %v1230, %v1275
        %v1277 = vpop.f32.mrb[0].mxu0
        %v1278 = vpop.f32.mrb[0].mxu0
        %v1279 = vpop.f32.mrb[0].mxu0
        %1280 = vdwg.mxu0
        %v1281 = vmax.f32 %v1276, 0.0
        %v1282 = vpack.c.bf16 %v1281, %v1281
        %1284 = vrot.lane.b32.xlu0 %v1225, 32
        %v1285 = vpop.permute.xlu0 %1284
        %v1288 = vsel %vm1150, %v1282, %v1285
        %v1289 = vld [vmem:[#allocation18] sm:$0xf]
        %v1290 = vld [vmem:[#allocation18 + $0x4] sm:$0xf]
        %v1291 = vld [vmem:[#allocation18 + $0x8] sm:$0xf]
        %v1292 = vld [vmem:[#allocation18 + $0xc] sm:$0xf]
        %v1293 = vld [vmem:[#allocation18 + $0x10] sm:$0x3]
        %v1294 = vlaneseq
        %v1295 = vshrl.u32 %v1294, 7
        %v1296 = vsub.s32 1, %v1295
        %v1297 = vrot.slane %v1036, %v1296
        %v1303 = vunpack.c.l.b16 %v1289
        %v1304 = vunpack.c.l.b16 %v1290
        %v1305 = vunpack.c.l.b16 %v1291
        %v1306 = vunpack.c.l.b16 %v1292
        %v1307 = vunpack.c.l.b16 %v1293
        %v1308 = vpack.c.b16 %v1304, %v1303
        %v1309 = vpack.c.b16 %v1306, %v1305
        %v1310 = vpack.c.b16 %v1307, %v1307
        %vm1313 = vcmask 285696
        %v1314 = vsel %vm1313, %v1288, 0
        %v1317 = vand.u32 %v1310, %v1237
        %1319 = vmatprep.subr.bf16.mxu0 0
        %1320 = vmatpush1.bf16.msra.mxu0 %v1308
        %1321 = vmatprep.subr.bf16.mxu0 0
        %1322 = vmatpush1.bf16.msra.mxu0 %v1309
        %1323 = vmatprep.subr.bf16.mxu0 0
        %1324 = vmatpush1.bf16.msra.mxu0 %v1317
        %1325 = vmatprep.subr.bf16.mxu0 0
        %1326 = vmatpush1.bf16.msra.mxu0 0
        %1327 = vmatprep.subr.bf16.mxu0 0
        %1328 = vmatpush1.bf16.msra.mxu0 0
        %1329 = vmatprep.subr.bf16.mxu0 0
        %1330 = vmatpush1.bf16.msra.mxu0 0
        %1331 = vmatprep.subr.bf16.mxu0 0
        %1332 = vmatpush1.bf16.msra.mxu0 0
        %1333 = vmatprep.subr.bf16.mxu0 0
        %1334 = vmatpush1.bf16.msra.mxu0 0
        %1335 = vmatprep.subr.bf16.mxu0 0
        %1336 = vmatpush1.bf16.msra.mxu0 0
        %1337 = vmatprep.subr.bf16.mxu0 0
        %1338 = vmatpush1.bf16.msra.mxu0 0
        %1339 = vmatprep.subr.bf16.mxu0 0
        %1340 = vmatpush1.bf16.msra.mxu0 0
        %1341 = vmatprep.subr.bf16.mxu0 0
        %1342 = vmatpush1.bf16.msra.mxu0 0
        %1343 = vmatprep.subr.bf16.mxu0 0
        %1344 = vmatpush1.bf16.msra.mxu0 0
        %1345 = vmatprep.subr.bf16.mxu0 0
        %1346 = vmatpush1.bf16.msra.mxu0 0
        %1347 = vmatprep.subr.bf16.mxu0 0
        %1348 = vmatpush1.bf16.msra.mxu0 0
        %1349 = vmatprep.subr.bf16.mxu0 0
        %1350 = vmatpush1.bf16.msra.mxu0 0
        %1351 = vmatprep.mubr.bf16.mxu0 0
        %1352 = vmatmul.mubr.bf16.gmra.mrb[0].mxu0 %v1314
        %v1353 = vpop.f32.mrb[0].mxu0
        %v1354 = vadd.f32 %v1297, %v1353
        %v1355 = vpop.f32.mrb[0].mxu0
        %v1356 = vpop.f32.mrb[0].mxu0
        %v1357 = vpop.f32.mrb[0].mxu0
        %1358 = vdwg.mxu0
        %1360 = vrot.lane.b32.xlu0 %v1354, 4
        %v1361 = vpop.permute.xlu0 %1360
        %v1363 = vsel %vm1097, %v1219, %v1361
        %v1364 = vpack.c.bf16 %v1363, %v1363
        %v1365 = vld [vmem:[#allocation20] sm:$0xf]
        %v1366 = vld [vmem:[#allocation21] sm:$0xff]
        %1368 = vset.pattern.permute.xlu0 0
        %1369 = vperm.xlu0 %1368, %v1366
        %v1370 = vpop.permute.xlu0 %1369
        %vm1372 = vcmask 64512
        %v1374 = vsel %vm1372, %v1365, 0
        %vm1376 = vcmask 1043456
        %v1378 = vsel %vm1376, %v1364, 0
        %1380 = vmatprep.subr.bf16.mxu0 0
        %1381 = vmatpush1.bf16.msra.mxu0 %v1378
        %1382 = vmatprep.subr.bf16.mxu0 0
        %1383 = vmatpush1.bf16.msra.mxu0 0
        %1384 = vmatprep.subr.bf16.mxu0 0
        %1385 = vmatpush1.bf16.msra.mxu0 0
        %1386 = vmatprep.subr.bf16.mxu0 0
        %1387 = vmatpush1.bf16.msra.mxu0 0
        %1388 = vmatprep.subr.bf16.mxu0 0
        %1389 = vmatpush1.bf16.msra.mxu0 0
        %1390 = vmatprep.subr.bf16.mxu0 0
        %1391 = vmatpush1.bf16.msra.mxu0 0
        %1392 = vmatprep.subr.bf16.mxu0 0
        %1393 = vmatpush1.bf16.msra.mxu0 0
        %1394 = vmatprep.subr.bf16.mxu0 0
        %1395 = vmatpush1.bf16.msra.mxu0 0
        %1396 = vmatprep.subr.bf16.mxu0 0
        %1397 = vmatpush1.bf16.msra.mxu0 0
        %1398 = vmatprep.subr.bf16.mxu0 0
        %1399 = vmatpush1.bf16.msra.mxu0 0
        %1400 = vmatprep.subr.bf16.mxu0 0
        %1401 = vmatpush1.bf16.msra.mxu0 0
        %1402 = vmatprep.subr.bf16.mxu0 0
        %1403 = vmatpush1.bf16.msra.mxu0 0
        %1404 = vmatprep.subr.bf16.mxu0 0
        %1405 = vmatpush1.bf16.msra.mxu0 0
        %1406 = vmatprep.subr.bf16.mxu0 0
        %1407 = vmatpush1.bf16.msra.mxu0 0
        %1408 = vmatprep.subr.bf16.mxu0 0
        %1409 = vmatpush1.bf16.msra.mxu0 0
        %1410 = vmatprep.subr.bf16.mxu0 0
        %1411 = vmatpush1.bf16.msra.mxu0 0
        %1412 = vmatprep.mubr.bf16.mxu0 0
        %1413 = vmatmul.mubr.bf16.gmra.mrb[0].mxu0 %v1374
        %v1414 = vpop.f32.mrb[0].mxu0
        %v1415 = vadd.f32 %v1370, %v1414
        %v1416 = vpop.f32.mrb[0].mxu0
        %v1417 = vpop.f32.mrb[0].mxu0
        %v1418 = vpop.f32.mrb[0].mxu0
        %1419 = vdwg.mxu0
        %v1420 = vmax.f32 %v1415, 0.0
        %v1421 = vadd.f32 %v1420, %v1363
        %v1422 = vpack.c.bf16 %v1421, %v1421
        %v1423 = vld [vmem:[#allocation23] sm:$0xf]
        %v1424 = vlaneseq
        %v1425 = vshrl.u32 %v1424, 7
        %v1426 = vsub.s32 2, %v1425
        %v1427 = vrot.slane %v1035, %v1426
        %v1429 = vsel %vm1372, %v1422, 0
        %v1432 = vsel %vm1376, %v1423, 0
        %1434 = vmatprep.subr.bf16.mxu0 0
        %1435 = vmatpush1.bf16.msra.mxu0 %v1432
        %1436 = vmatprep.subr.bf16.mxu0 0
        %1437 = vmatpush1.bf16.msra.mxu0 0
        %1438 = vmatprep.subr.bf16.mxu0 0
        %1439 = vmatpush1.bf16.msra.mxu0 0
        %1440 = vmatprep.subr.bf16.mxu0 0
        %1441 = vmatpush1.bf16.msra.mxu0 0
        %1442 = vmatprep.subr.bf16.mxu0 0
        %1443 = vmatpush1.bf16.msra.mxu0 0
        %1444 = vmatprep.subr.bf16.mxu0 0
        %1445 = vmatpush1.bf16.msra.mxu0 0
        %1446 = vmatprep.subr.bf16.mxu0 0
        %1447 = vmatpush1.bf16.msra.mxu0 0
        %1448 = vmatprep.subr.bf16.mxu0 0
        %1449 = vmatpush1.bf16.msra.mxu0 0
        %1450 = vmatprep.subr.bf16.mxu0 0
        %1451 = vmatpush1.bf16.msra.mxu0 0
        %1452 = vmatprep.subr.bf16.mxu0 0
        %1453 = vmatpush1.bf16.msra.mxu0 0
        %1454 = vmatprep.subr.bf16.mxu0 0
        %1455 = vmatpush1.bf16.msra.mxu0 0
        %1456 = vmatprep.subr.bf16.mxu0 0
        %1457 = vmatpush1.bf16.msra.mxu0 0
        %1458 = vmatprep.subr.bf16.mxu0 0
        %1459 = vmatpush1.bf16.msra.mxu0 0
        %1460 = vmatprep.subr.bf16.mxu0 0
        %1461 = vmatpush1.bf16.msra.mxu0 0
        %1462 = vmatprep.subr.bf16.mxu0 0
        %1463 = vmatpush1.bf16.msra.mxu0 0
        %1464 = vmatprep.subr.bf16.mxu0 0
        %1465 = vmatpush1.bf16.msra.mxu0 0
        %1466 = vmatprep.mubr.bf16.mxu0 0
        %1467 = vmatmul.mubr.bf16.gmra.mrb[0].mxu0 %v1429
        %v1468 = vpop.f32.mrb[0].mxu0
        %v1469 = vadd.f32 %v1427, %v1468
        %v1470 = vpop.f32.mrb[0].mxu0
        %v1471 = vpop.f32.mrb[0].mxu0
        %v1472 = vpop.f32.mrb[0].mxu0
        %1473 = vdwg.mxu0
        %v1474 = vmax.f32 %v1469, 0.0
        %v1475 = vpack.c.bf16 %v1474, %v1474
        %1477 = vrot.lane.b32.xlu0 %v1422, 32
        %v1478 = vpop.permute.xlu0 %1477
        %v1481 = vsel %vm1150, %v1475, %v1478
        %v1482 = vld [vmem:[#allocation24] sm:$0xf]
        %v1483 = vld [vmem:[#allocation24 + $0x4] sm:$0xf]
        %v1484 = vld [vmem:[#allocation24 + $0x8] sm:$0xf]
        %v1485 = vld [vmem:[#allocation24 + $0xc] sm:$0xf]
        %v1486 = vld [vmem:[#allocation24 + $0x10] sm:$0xf]
        %v1487 = vlaneseq
        %v1488 = vshrl.u32 %v1487, 7
        %v1489 = vsub.s32 2, %v1488
        %v1490 = vrot.slane %v1036, %v1489
        %v1496 = vunpack.c.l.b16 %v1482
        %v1497 = vunpack.c.l.b16 %v1483
        %v1498 = vunpack.c.l.b16 %v1484
        %v1499 = vunpack.c.l.b16 %v1485
        %v1500 = vunpack.c.l.b16 %v1486
        %v1501 = vpack.c.b16 %v1497, %v1496
        %v1502 = vpack.c.b16 %v1499, %v1498
        %v1503 = vpack.c.b16 %v1500, %v1500
        %vm1506 = vcmask 326656
        %v1507 = vsel %vm1506, %v1481, 0
        %v1510 = vsel %vm1376, %v1503, 0
        %1512 = vmatprep.subr.bf16.mxu0 0
        %1513 = vmatpush1.bf16.msra.mxu0 %v1501
        %1514 = vmatprep.subr.bf16.mxu0 0
        %1515 = vmatpush1.bf16.msra.mxu0 %v1502
        %1516 = vmatprep.subr.bf16.mxu0 0
        %1517 = vmatpush1.bf16.msra.mxu0 %v1510
        %1518 = vmatprep.subr.bf16.mxu0 0
        %1519 = vmatpush1.bf16.msra.mxu0 0
        %1520 = vmatprep.subr.bf16.mxu0 0
        %1521 = vmatpush1.bf16.msra.mxu0 0
        %1522 = vmatprep.subr.bf16.mxu0 0
        %1523 = vmatpush1.bf16.msra.mxu0 0
        %1524 = vmatprep.subr.bf16.mxu0 0
        %1525 = vmatpush1.bf16.msra.mxu0 0
        %1526 = vmatprep.subr.bf16.mxu0 0
        %1527 = vmatpush1.bf16.msra.mxu0 0
        %1528 = vmatprep.subr.bf16.mxu0 0
        %1529 = vmatpush1.bf16.msra.mxu0 0
        %1530 = vmatprep.subr.bf16.mxu0 0
        %1531 = vmatpush1.bf16.msra.mxu0 0
        %1532 = vmatprep.subr.bf16.mxu0 0
        %1533 = vmatpush1.bf16.msra.mxu0 0
        %1534 = vmatprep.subr.bf16.mxu0 0
        %1535 = vmatpush1.bf16.msra.mxu0 0
        %1536 = vmatprep.subr.bf16.mxu0 0
        %1537 = vmatpush1.bf16.msra.mxu0 0
        %1538 = vmatprep.subr.bf16.mxu0 0
        %1539 = vmatpush1.bf16.msra.mxu0 0
        %1540 = vmatprep.subr.bf16.mxu0 0
        %1541 = vmatpush1.bf16.msra.mxu0 0
        %1542 = vmatprep.subr.bf16.mxu0 0
        %1543 = vmatpush1.bf16.msra.mxu0 0
        %1544 = vmatprep.mubr.bf16.mxu0 0
        %1545 = vmatmul.mubr.bf16.gmra.mrb[0].mxu0 %v1507
        %v1546 = vpop.f32.mrb[0].mxu0
        %v1547 = vadd.f32 %v1490, %v1546
        %v1548 = vpop.f32.mrb[0].mxu0
        %v1549 = vpop.f32.mrb[0].mxu0
        %v1550 = vpop.f32.mrb[0].mxu0
        %1551 = vdwg.mxu0
        %v1552 = vpack.c.bf16 %v1547, %v1547
        %v1553 = vld [vmem:[#allocation26] sm:$0xf]
        %v1554 = vld [vmem:[#allocation27] sm:$0xff]
        %1556 = vset.pattern.permute.xlu0 0
        %1557 = vperm.xlu0 %1556, %v1554
        %v1558 = vpop.permute.xlu0 %1557
        %v1561 = vsel %vm1372, %v1553, 0
        %v1564 = vsel %vm1376, %v1552, 0
        %1566 = vmatprep.subr.bf16.mxu0 0
        %1567 = vmatpush1.bf16.msra.mxu0 %v1564
        %1568 = vmatprep.subr.bf16.mxu0 0
        %1569 = vmatpush1.bf16.msra.mxu0 0
        %1570 = vmatprep.subr.bf16.mxu0 0
        %1571 = vmatpush1.bf16.msra.mxu0 0
        %1572 = vmatprep.subr.bf16.mxu0 0
        %1573 = vmatpush1.bf16.msra.mxu0 0
        %1574 = vmatprep.subr.bf16.mxu0 0
        %1575 = vmatpush1.bf16.msra.mxu0 0
        %1576 = vmatprep.subr.bf16.mxu0 0
        %1577 = vmatpush1.bf16.msra.mxu0 0
        %1578 = vmatprep.subr.bf16.mxu0 0
        %1579 = vmatpush1.bf16.msra.mxu0 0
        %1580 = vmatprep.subr.bf16.mxu0 0
        %1581 = vmatpush1.bf16.msra.mxu0 0
        %1582 = vmatprep.subr.bf16.mxu0 0
        %1583 = vmatpush1.bf16.msra.mxu0 0
        %1584 = vmatprep.subr.bf16.mxu0 0
        %1585 = vmatpush1.bf16.msra.mxu0 0
        %1586 = vmatprep.subr.bf16.mxu0 0
        %1587 = vmatpush1.bf16.msra.mxu0 0
        %1588 = vmatprep.subr.bf16.mxu0 0
        %1589 = vmatpush1.bf16.msra.mxu0 0
        %1590 = vmatprep.subr.bf16.mxu0 0
        %1591 = vmatpush1.bf16.msra.mxu0 0
        %1592 = vmatprep.subr.bf16.mxu0 0
        %1593 = vmatpush1.bf16.msra.mxu0 0
        %1594 = vmatprep.subr.bf16.mxu0 0
        %1595 = vmatpush1.bf16.msra.mxu0 0
        %1596 = vmatprep.subr.bf16.mxu0 0
        %1597 = vmatpush1.bf16.msra.mxu0 0
        %1598 = vmatprep.mubr.bf16.mxu0 0
        %1599 = vmatmul.mubr.bf16.gmra.mrb[0].mxu0 %v1561
        %v1600 = vpop.f32.mrb[0].mxu0
        %v1601 = vadd.f32 %v1558, %v1600
        %v1602 = vpop.f32.mrb[0].mxu0
        %v1603 = vpop.f32.mrb[0].mxu0
        %v1604 = vpop.f32.mrb[0].mxu0
        %1605 = vdwg.mxu0
        %v1606 = vmax.f32 %v1601, 0.0
        %v1607 = vadd.f32 %v1606, %v1547
        %v1608 = vpack.c.bf16 %v1607, %v1607
        %v1609 = vld [vmem:[#allocation29] sm:$0x3]
        %v1610 = vlaneseq
        %v1611 = vshrl.u32 %v1610, 7
        %v1612 = vsub.s32 3, %v1611
        %v1613 = vrot.slane %v1035, %v1612
        %v1615 = vsel %vm1097, %v1608, 0
        %v1618 = vsel %vm1101, %v1609, 0
        %1620 = vmatprep.subr.bf16.mxu0 0
        %1621 = vmatpush1.bf16.msra.mxu0 %v1618
        %1622 = vmatprep.subr.bf16.mxu0 0
        %1623 = vmatpush1.bf16.msra.mxu0 0
        %1624 = vmatprep.subr.bf16.mxu0 0
        %1625 = vmatpush1.bf16.msra.mxu0 0
        %1626 = vmatprep.subr.bf16.mxu0 0
        %1627 = vmatpush1.bf16.msra.mxu0 0
        %1628 = vmatprep.subr.bf16.mxu0 0
        %1629 = vmatpush1.bf16.msra.mxu0 0
        %1630 = vmatprep.subr.bf16.mxu0 0
        %1631 = vmatpush1.bf16.msra.mxu0 0
        %1632 = vmatprep.subr.bf16.mxu0 0
        %1633 = vmatpush1.bf16.msra.mxu0 0
        %1634 = vmatprep.subr.bf16.mxu0 0
        %1635 = vmatpush1.bf16.msra.mxu0 0
        %1636 = vmatprep.subr.bf16.mxu0 0
        %1637 = vmatpush1.bf16.msra.mxu0 0
        %1638 = vmatprep.subr.bf16.mxu0 0
        %1639 = vmatpush1.bf16.msra.mxu0 0
        %1640 = vmatprep.subr.bf16.mxu0 0
        %1641 = vmatpush1.bf16.msra.mxu0 0
        %1642 = vmatprep.subr.bf16.mxu0 0
        %1643 = vmatpush1.bf16.msra.mxu0 0
        %1644 = vmatprep.subr.bf16.mxu0 0
        %1645 = vmatpush1.bf16.msra.mxu0 0
        %1646 = vmatprep.subr.bf16.mxu0 0
        %1647 = vmatpush1.bf16.msra.mxu0 0
        %1648 = vmatprep.subr.bf16.mxu0 0
        %1649 = vmatpush1.bf16.msra.mxu0 0
        %1650 = vmatprep.subr.bf16.mxu0 0
        %1651 = vmatpush1.bf16.msra.mxu0 0
        %1652 = vmatprep.mubr.bf16.mxu0 0
        %1653 = vmatmul.mubr.bf16.gmra.mrb[0].mxu0 %v1615
        %v1654 = vpop.f32.mrb[0].mxu0
        %v1655 = vadd.f32 %v1613, %v1654
        %v1656 = vpop.f32.mrb[0].mxu0
        %v1657 = vpop.f32.mrb[0].mxu0
        %v1658 = vpop.f32.mrb[0].mxu0
        %1659 = vdwg.mxu0
        %v1660 = vmax.f32 %v1655, 0.0
        %v1661 = vpack.c.bf16 %v1660, %v1660
        %1663 = vrot.lane.b32.xlu0 %v1608, 32
        %v1664 = vpop.permute.xlu0 %1663
        %v1667 = vsel %vm1150, %v1661, %v1664
        %v1668 = vld [vmem:[#allocation30] sm:$0xf]
        %v1669 = vld [vmem:[#allocation30 + $0x4] sm:$0xf]
        %v1670 = vld [vmem:[#allocation30 + $0x8] sm:$0xf]
        %v1671 = vld [vmem:[#allocation30 + $0xc] sm:$0xf]
        %v1672 = vld [vmem:[#allocation30 + $0x10] sm:$0x3]
        %v1673 = vlaneseq
        %v1674 = vshrl.u32 %v1673, 7
        %v1675 = vsub.s32 3, %v1674
        %v1676 = vrot.slane %v1036, %v1675
        %v1682 = vunpack.c.l.b16 %v1668
        %v1683 = vunpack.c.l.b16 %v1669
        %v1684 = vunpack.c.l.b16 %v1670
        %v1685 = vunpack.c.l.b16 %v1671
        %v1686 = vunpack.c.l.b16 %v1672
        %v1687 = vpack.c.b16 %v1683, %v1682
        %v1688 = vpack.c.b16 %v1685, %v1684
        %v1689 = vpack.c.b16 %v1686, %v1686
        %v1692 = vsel %vm1178, %v1667, 0
        %v1695 = vsel %vm1101, %v1689, 0
        %1697 = vmatprep.subr.bf16.mxu0 0
        %1698 = vmatpush1.bf16.msra.mxu0 %v1687
        %1699 = vmatprep.subr.bf16.mxu0 0
        %1700 = vmatpush1.bf16.msra.mxu0 %v1688
        %1701 = vmatprep.subr.bf16.mxu0 0
        %1702 = vmatpush1.bf16.msra.mxu0 %v1695
        %1703 = vmatprep.subr.bf16.mxu0 0
        %1704 = vmatpush1.bf16.msra.mxu0 0
        %1705 = vmatprep.subr.bf16.mxu0 0
        %1706 = vmatpush1.bf16.msra.mxu0 0
        %1707 = vmatprep.subr.bf16.mxu0 0
        %1708 = vmatpush1.bf16.msra.mxu0 0
        %1709 = vmatprep.subr.bf16.mxu0 0
        %1710 = vmatpush1.bf16.msra.mxu0 0
        %1711 = vmatprep.subr.bf16.mxu0 0
        %1712 = vmatpush1.bf16.msra.mxu0 0
        %1713 = vmatprep.subr.bf16.mxu0 0
        %1714 = vmatpush1.bf16.msra.mxu0 0
        %1715 = vmatprep.subr.bf16.mxu0 0
        %1716 = vmatpush1.bf16.msra.mxu0 0
        %1717 = vmatprep.subr.bf16.mxu0 0
        %1718 = vmatpush1.bf16.msra.mxu0 0
        %1719 = vmatprep.subr.bf16.mxu0 0
        %1720 = vmatpush1.bf16.msra.mxu0 0
        %1721 = vmatprep.subr.bf16.mxu0 0
        %1722 = vmatpush1.bf16.msra.mxu0 0
        %1723 = vmatprep.subr.bf16.mxu0 0
        %1724 = vmatpush1.bf16.msra.mxu0 0
        %1725 = vmatprep.subr.bf16.mxu0 0
        %1726 = vmatpush1.bf16.msra.mxu0 0
        %1727 = vmatprep.subr.bf16.mxu0 0
        %1728 = vmatpush1.bf16.msra.mxu0 0
        %1729 = vmatprep.mubr.bf16.mxu0 0
        %1730 = vmatmul.mubr.bf16.gmra.mrb[0].mxu0 %v1692
        %v1731 = vpop.f32.mrb[0].mxu0
        %v1732 = vadd.f32 %v1676, %v1731
        %v1733 = vpop.f32.mrb[0].mxu0
        %v1734 = vpop.f32.mrb[0].mxu0
        %v1735 = vpop.f32.mrb[0].mxu0
        %1736 = vdwg.mxu0
        %v1737 = vpack.c.bf16 %v1732, %v1732
        %v1738 = vld [vmem:[#allocation32] sm:$0x3]
        %v1739 = vld [vmem:[#allocation33] sm:$0x1]
        %v1741 = vlaneseq
        %v1742 = vshrl.u32 %v1741, 7
        %v1743 = vsub.s32 0, %v1742
        %v1744 = vrot.slane %v1739, %v1743
        %v1747 = vsel %vm1097, %v1737, 0
        %v1750 = vsel %vm1101, %v1738, 0
        %1752 = vmatprep.subr.bf16.mxu0 0
        %1753 = vmatpush1.bf16.msra.mxu0 %v1750
        %1754 = vmatprep.subr.bf16.mxu0 0
        %1755 = vmatpush1.bf16.msra.mxu0 0
        %1756 = vmatprep.subr.bf16.mxu0 0
        %1757 = vmatpush1.bf16.msra.mxu0 0
        %1758 = vmatprep.subr.bf16.mxu0 0
        %1759 = vmatpush1.bf16.msra.mxu0 0
        %1760 = vmatprep.subr.bf16.mxu0 0
        %1761 = vmatpush1.bf16.msra.mxu0 0
        %1762 = vmatprep.subr.bf16.mxu0 0
        %1763 = vmatpush1.bf16.msra.mxu0 0
        %1764 = vmatprep.subr.bf16.mxu0 0
        %1765 = vmatpush1.bf16.msra.mxu0 0
        %1766 = vmatprep.subr.bf16.mxu0 0
        %1767 = vmatpush1.bf16.msra.mxu0 0
        %1768 = vmatprep.subr.bf16.mxu0 0
        %1769 = vmatpush1.bf16.msra.mxu0 0
        %1770 = vmatprep.subr.bf16.mxu0 0
        %1771 = vmatpush1.bf16.msra.mxu0 0
        %1772 = vmatprep.subr.bf16.mxu0 0
        %1773 = vmatpush1.bf16.msra.mxu0 0
        %1774 = vmatprep.subr.bf16.mxu0 0
        %1775 = vmatpush1.bf16.msra.mxu0 0
        %1776 = vmatprep.subr.bf16.mxu0 0
        %1777 = vmatpush1.bf16.msra.mxu0 0
        %1778 = vmatprep.subr.bf16.mxu0 0
        %1779 = vmatpush1.bf16.msra.mxu0 0
        %1780 = vmatprep.subr.bf16.mxu0 0
        %1781 = vmatpush1.bf16.msra.mxu0 0
        %1782 = vmatprep.subr.bf16.mxu0 0
        %1783 = vmatpush1.bf16.msra.mxu0 0
        %1784 = vmatprep.mubr.bf16.mxu0 0
        %1785 = vmatmul.mubr.bf16.gmra.mrb[0].mxu0 %v1747
        %v1786 = vpop.f32.mrb[0].mxu0
        %v1787 = vadd.f32 %v1744, %v1786
        %v1788 = vpop.f32.mrb[0].mxu0
        %v1789 = vpop.f32.mrb[0].mxu0
        %v1790 = vpop.f32.mrb[0].mxu0
        %1791 = vdwg.mxu0
        %v1792 = vmax.f32 %v1787, 0.0
        %v1793 = vpack.c.bf16 %v1792, %v1792
        %v1794 = vld [vmem:[#allocation35] sm:$0xf]
        %v1795 = vld [vmem:[#allocation35 + $0x4] sm:$0xf]
        %v1796 = vld [vmem:[#allocation35 + $0x8] sm:$0xf]
        %v1797 = vld [vmem:[#allocation35 + $0xc] sm:$0xf]
        %v1798 = vld [vmem:[#allocation2] sm:$0x1]
        %v1800 = vlaneseq
        %v1801 = vshrl.u32 %v1800, 7
        %v1802 = vsub.s32 0, %v1801
        %v1803 = vrot.slane %v1798, %v1802
        %v1809 = vunpack.c.l.b16 %v1794
        %v1810 = vunpack.c.l.b16 %v1795
        %v1811 = vunpack.c.l.b16 %v1796
        %v1812 = vunpack.c.l.b16 %v1797
        %v1813 = vpack.c.b16 %v1810, %v1809
        %v1814 = vpack.c.b16 %v1812, %v1811
        %v1818 = vsel %vm1150, %v1793, 0
        %1820 = vmatprep.subr.bf16.mxu0 0
        %1821 = vmatpush1.bf16.msra.mxu0 %v1813
        %1822 = vmatprep.subr.bf16.mxu0 0
        %1823 = vmatpush1.bf16.msra.mxu0 %v1814
        %1824 = vmatprep.subr.bf16.mxu0 0
        %1825 = vmatpush1.bf16.msra.mxu0 0
        %1826 = vmatprep.subr.bf16.mxu0 0
        %1827 = vmatpush1.bf16.msra.mxu0 0
        %1828 = vmatprep.subr.bf16.mxu0 0
        %1829 = vmatpush1.bf16.msra.mxu0 0
        %1830 = vmatprep.subr.bf16.mxu0 0
        %1831 = vmatpush1.bf16.msra.mxu0 0
        %1832 = vmatprep.subr.bf16.mxu0 0
        %1833 = vmatpush1.bf16.msra.mxu0 0
        %1834 = vmatprep.subr.bf16.mxu0 0
        %1835 = vmatpush1.bf16.msra.mxu0 0
        %1836 = vmatprep.subr.bf16.mxu0 0
        %1837 = vmatpush1.bf16.msra.mxu0 0
        %1838 = vmatprep.subr.bf16.mxu0 0
        %1839 = vmatpush1.bf16.msra.mxu0 0
        %1840 = vmatprep.subr.bf16.mxu0 0
        %1841 = vmatpush1.bf16.msra.mxu0 0
        %1842 = vmatprep.subr.bf16.mxu0 0
        %1843 = vmatpush1.bf16.msra.mxu0 0
        %1844 = vmatprep.subr.bf16.mxu0 0
        %1845 = vmatpush1.bf16.msra.mxu0 0
        %1846 = vmatprep.subr.bf16.mxu0 0
        %1847 = vmatpush1.bf16.msra.mxu0 0
        %1848 = vmatprep.subr.bf16.mxu0 0
        %1849 = vmatpush1.bf16.msra.mxu0 0
        %1850 = vmatprep.subr.bf16.mxu0 0
        %1851 = vmatpush1.bf16.msra.mxu0 0
        %1852 = vmatprep.mubr.bf16.mxu0 0
        %1853 = vmatmul.mubr.bf16.gmra.mrb[0].mxu0 %v1818
        %v1854 = vpop.f32.mrb[0].mxu0
        %v1855 = vadd.f32 %v1803, %v1854
        %v1856 = vpop.f32.mrb[0].mxu0
        %v1857 = vpop.f32.mrb[0].mxu0
        %v1858 = vpop.f32.mrb[0].mxu0
        %1859 = vdwg.mxu0
        %vm1860 = vcmask 7168
        %1861 = vst.msk [vmem:[%s1033] sm:$0xff] %vm1860, %v1855
        %s1862 = sand.u32 %s545, 1
        %s1863 = scalar_lea.sflag [#allocation5], %s1862
        %s1864 = sand.u32 %s545, 1
        %s1865 = smul.addr %s1864, 8
        %s1866 = scalar_lea.vmem [#allocation36], %s1865
        // Predicated region
        $region193: #{_lambda_.1} parent=107 // pred_check
          %p1867 = pneg %p555
        $region194: #{_lambda_.1} parent=107 // pred_check_branch
          %1869 = sbr.rel (%p1867) target = $region196
        $region195: #{_lambda_.1} parent=107 // pred_region
          %s1871 = ssub.s32 128, 128
          %1872 = vsyncadd %s1863, %s1871
          %s1873 = smul.addr %s55, 128
          %s1874 = scalar_lea.hbm %s22, %s1873
          %s1876 = sshll.u32 %s1866, 4
          %s1877 = int_to_ptr.vmem [resolvable:$true] %s1876
          %1879 = dma.vmem_to_hbm [thread:$0]  %s1877, 128, %s1874, %s1863
        $region196: #{_lambda_.1} parent=107 // pred_fallthru
          _
      $region108: #{_lambda_.1} parent=5 // pred_fallthru
        _
      %p1880 = scmp.le.s32.totalorder 2, %s50
      // Predicated region
      $region197: #{_lambda_.1} parent=5 // pred_check
        %p1881 = pneg %p1880
      $region198: #{_lambda_.1} parent=5 // pred_check_branch
        %1883 = sbr.rel (%p1881) target = $region200
      $region199: #{_lambda_.1} parent=5 // pred_region
        %s1884 = ssub.s32 %s50, 2
        // Predicated region
        $region201: #{_lambda_.1} parent=199 // pred_check
          %p1885 = pneg %p561
        $region202: #{_lambda_.1} parent=199 // pred_check_branch
          %1887 = sbr.rel (%p1885) target = $region204
        $region203: #{_lambda_.1} parent=199 // pred_region
          %s1888 = sand.u32 %s546, 1
          %s1889 = scalar_lea.sflag [#allocation5], %s1888
          %s1890 = sand.u32 %s546, 1
          %s1891 = smul.addr %s1890, 8
          %s1892 = scalar_lea.vmem [#allocation36], %s1891
          %1893 = dma.done %s1889, 128
        $region204: #{_lambda_.1} parent=199 // pred_fallthru
          _
      $region200: #{_lambda_.1} parent=5 // pred_fallthru
        _
    $region6: #{_lambda_.1} parent=1 // loop_footer
      %s54 = sadd.s32 1, %s50
    $region7: #{_lambda_.1} parent=1 // loop_footer_branch
      %49 = sbr.rel target = $region3
    $region8: #{_lambda_.1} parent=1 // loop_exit
      _
    %1894 = vsyncpa [#allocation4], 1
    %s1895 = scalar_lea.sflag [#allocation4], 1
    %1896 = vsyncpa %s1895, 1
    %1897 = vsyncpa [#allocation7], 1
    %s1898 = scalar_lea.sflag [#allocation7], 1
    %1899 = vsyncpa %s1898, 1
    %1900 = vsyncpa [#allocation10], 1
    %s1901 = scalar_lea.sflag [#allocation10], 1
    %1902 = vsyncpa %s1901, 1
    %1903 = vsyncpa [#allocation13], 1
    %1904 = vsyncpa [#allocation16], 1
    %1905 = vsyncpa [#allocation19], 1
    %1906 = vsyncpa [#allocation22], 1
    %1907 = vsyncpa [#allocation25], 1
    %1908 = vsyncpa [#allocation28], 1
    %1909 = vsyncpa [#allocation31], 1
    %1910 = vsyncpa [#allocation34], 1
    %1911 = vsyncpa [#allocation5], 1
    %s1912 = scalar_lea.sflag [#allocation5], 1
    %1913 = vsyncpa %s1912, 1

</llo_original>
